<compile_context>
chip_gen: v7x
topology: tpu7x:2x2x1
jax: 0.10.0
libtpu: 0.0.40
codegen_flags: <defaults>
</compile_context>

<pallas_src>
import math

import jax
import jax.numpy as jnp
from jax.experimental import pallas as pl
from jax.experimental.pallas import tpu as pltpu


# ---------------------------------------------------------------------------
# Fused kernel: GCN -> (permute) -> biGRU -> BatchNorm1d, lane-dense output
#   gw_ref      (1,1)  SMEM   gcn weight (==10)
#   hadjT_ref   (B,N,N)       adjacency, transposed per batch (Hadj^T)
#   xt_ref      (B,F,N)       node features, transposed per batch (X^T)
#   wih_ref     (N,6H)        [W_ih_f^T | W_ih_b^T]
#   bih_ref     (1,6H)        [b_ih_f   | b_ih_b  ]
#   whh_ref     (H,6H)        [W_hh_f^T | W_hh_b^T]
#   bhh_ref     (2,3H)        row0=b_hh_f, row1=b_hh_b
#   gamma_ref   (F,1), beta_ref (F,1)
#   o_ref       (F,B*2H)      lane-dense BN'd GRU output (wrapper permutes)
# ---------------------------------------------------------------------------
def stdcn_gru_fused_kernel(gw_ref, hadjT_ref, xt_ref, wih_ref, bih_ref,
                           whh_ref, bhh_ref, gamma_ref, beta_ref, o_ref):
    B, F, N = xt_ref.shape
    H = whh_ref.shape[0]
    G3 = 3 * H
    C = 2 * H
    T = F
    gw = gw_ref[0, 0]

    # hoisted diagonal mask (built once, reused for every batch)
    row = jax.lax.broadcasted_iota(jnp.int32, (N, N), 0)
    col = jax.lax.broadcasted_iota(jnp.int32, (N, N), 1)
    diag = row == col

    # ---- 1. GCN norm + conv + leaky_relu, already in (F, N) layout ---------
    # y_b[f,i] = leaky( gw * sum_j dinv[j] * X[b,j,f] * Hm[b,i,j] * dinv[i] )
    # With X^T and Hadj^T as inputs this is one standard (F,N)@(N,N) matmul
    # per batch; both D^-1/2 scalings are lane-broadcast multiplies.
    xg = []
    for b in range(B):
        HmT = jnp.where(diag, 1.0, hadjT_ref[b])                # (N,N), diag=1
        deg = jnp.sum(HmT, axis=0, keepdims=True)               # (1,N) row sums of Hm
        dinv = jax.lax.rsqrt(deg)                               # (1,N)
        xs = xt_ref[b] * dinv                                   # (F,N) * (1,N)
        y = jnp.dot(xs, HmT, preferred_element_type=jnp.float32)  # (F,N)
        y = y * (dinv * gw)
        y = jnp.where(y > 0, y, 0.01 * y)                       # leaky_relu(0.01)
        xg.append(y)

    # ---- 2. time-major interleaved sequence + fused fwd/bwd projection -----
    # Row layout per step t (2B rows): [fwd b0..bB-1 @ t | bwd b0..bB-1 @ T-1-t]
    rows = []
    for t in range(T):
        s = T - 1 - t
        for b in range(B):
            rows.append(xg[b][t:t + 1, :])
        for b in range(B):
            rows.append(xg[b][s:s + 1, :])
    x_cat = jnp.concatenate(rows, axis=0)                       # (T*2B, N)

    xp6 = (jnp.dot(x_cat, wih_ref[...], preferred_element_type=jnp.float32)
           + bih_ref[...])                                      # (T*2B, 6H)

    # direction masks: within each 2B step-group, rows 0..B-1 are forward
    fm = (jax.lax.broadcasted_iota(jnp.int32, (2 * B, G3), 0)
          < B).astype(jnp.float32)                              # (2B, 3H)
    bm = 1.0 - fm
    fm_full = jnp.concatenate([fm] * T, axis=0)                 # (T*2B, 3H)
    bm_full = 1.0 - fm_full
    # per-direction gate-column select, hoisted out of the recurrence
    Gx = xp6[:, 0:G3] * fm_full + xp6[:, G3:2 * G3] * bm_full   # (T*2B, 3H)

    bhh = bhh_ref[0:1, :] * fm + bhh_ref[1:2, :] * bm           # (2B, 3H)
    whh = whh_ref[...]                                          # (H, 6H), hoisted

    # ---- 3. bidirectional GRU, batched over (batch, direction), unrolled ---
    h = jnp.zeros((2 * B, H), jnp.float32)      # rows: [fwd b0..bB-1, bwd b0..bB-1]
    hs = []
    for t in range(T):                                          # static unroll, T=8
        xpt = Gx[t * 2 * B:(t + 1) * 2 * B, :]                  # aligned (2B, 3H)
        hp6 = jnp.dot(h, whh, preferred_element_type=jnp.float32)   # (2B, 6H)
        hp = hp6[:, 0:G3] * fm + hp6[:, G3:2 * G3] * bm + bhh
        rz = jax.nn.sigmoid(xpt[:, 0:C] + hp[:, 0:C])           # merged r|z sigmoid
        r = rz[:, 0:H]
        z = rz[:, H:C]
        n = jnp.tanh(xpt[:, C:G3] + r * hp[:, C:G3])
        h = (1.0 - z) * n + z * h                               # (2B, H)
        hs.append(h)

    # ---- 4. assemble lane-dense (F, B*2H) GRU output (no VMEM scratch) -----
    # column layout: [b0: fwd H | bwd H][b1: fwd H | bwd H] ...
    yrows = []
    for t in range(T):
        s = T - 1 - t
        parts = []
        for b in range(B):
            parts.append(hs[t][b:b + 1, :])                     # fwd hidden @ t
            parts.append(hs[s][B + b:B + b + 1, :])             # bwd hidden @ t
        yrows.append(jnp.concatenate(parts, axis=1))            # (1, B*2H)
    Y = jnp.concatenate(yrows, axis=0)                          # (F, B*2H) = (8,128)

    # ---- 5. BatchNorm1d(num_f), training stats over (batch, 2H) lanes ------
    mean = jnp.mean(Y, axis=1, keepdims=True)                   # (F, 1)
    cen = Y - mean
    var = jnp.mean(cen * cen, axis=1, keepdims=True)
    o_ref[...] = (gamma_ref[...] * cen * jax.lax.rsqrt(var + 1e-5)
                  + beta_ref[...])                              # single (8,128) store


# ---------------------------------------------------------------------------
# Wrapper: single pallas_call; input/output layout plumbing stays in the jit
# ---------------------------------------------------------------------------
def stdcn_with_gru_forward(X, Hadj, params):
    B, N, F = X.shape
    H = params["w_hh_stk"].shape[0]
    C = 2 * H
    vmem = pltpu.MemorySpace.VMEM
    # layout plumbing only (few KB): pre-transpose inputs so every in-kernel
    # matmul is a standard contraction; post-permute the lane-dense result.
    Xt = jnp.transpose(X, (0, 2, 1))            # (B, F, N)
    HadjT = jnp.transpose(Hadj, (0, 2, 1))      # (B, N, N)
    y = pl.pallas_call(
        stdcn_gru_fused_kernel,
        out_shape=jax.ShapeDtypeStruct((F, B * C), jnp.float32),
        in_specs=[
            pl.BlockSpec(memory_space=pltpu.MemorySpace.SMEM),  # gcn weight (1,1)
            pl.BlockSpec(memory_space=vmem),  # Hadj^T    (B,N,N)
            pl.BlockSpec(memory_space=vmem),  # X^T       (B,F,N)
            pl.BlockSpec(memory_space=vmem),  # w_ih_comb (N,6H)
            pl.BlockSpec(memory_space=vmem),  # b_ih_comb (1,6H)
            pl.BlockSpec(memory_space=vmem),  # w_hh_stk  (H,6H)
            pl.BlockSpec(memory_space=vmem),  # b_hh_2    (2,3H)
            pl.BlockSpec(memory_space=vmem),  # bn gamma  (F,1)
            pl.BlockSpec(memory_space=vmem),  # bn beta   (F,1)
        ],
        out_specs=pl.BlockSpec(memory_space=vmem),
    )(params["gcn_weight"], HadjT, Xt,
      params["w_ih_comb"], params["b_ih_comb"],
      params["w_hh_stk"], params["b_hh_2"],
      params["bn_gamma_col"], params["bn_beta_col"])
    # final (0,2,1) permute of the tiny (F, B, 2H) result -> (B, 2H, F)
    return jnp.transpose(y.reshape(F, B, C), (1, 2, 0))


# ---------------------------------------------------------------------------
# Pure-JAX reference (mirrors the PyTorch forward) for a correctness check
# ---------------------------------------------------------------------------
def reference_forward(X, Hadj, params):
    B, N, F = X.shape
    Hdim = params["w_hh_f_T"].shape[0]
    eye = jnp.eye(N, dtype=jnp.float32)
    Hm = Hadj * (eye == 0) + eye
    deg = jnp.sum(Hm, axis=-1)
    dinv = deg ** -0.5
    Hn = dinv[:, :, None] * Hm * dinv[:, None, :]
    Xc = jnp.einsum("bij,bjf->bif", Hn, X) * params["gcn_weight"][0, 0]
    Xc = jnp.where(Xc > 0, Xc, 0.01 * Xc)
    x_seq = jnp.transpose(Xc, (0, 2, 1))  # (B, F, N)

    def gru_dir(xs, wiT, whT, bi, bh):
        def step(h, x_t):
            xpv = x_t @ wiT + bi
            hpv = h @ whT + bh
            xr, xz, xn = jnp.split(xpv, 3, axis=-1)
            hr, hz, hn = jnp.split(hpv, 3, axis=-1)
            r = jax.nn.sigmoid(xr + hr)
            z = jax.nn.sigmoid(xz + hz)
            n = jnp.tanh(xn + r * hn)
            h_new = (1.0 - z) * n + z * h
            return h_new, h_new

        h0 = jnp.zeros((xs.shape[0], Hdim), jnp.float32)
        _, hs = jax.lax.scan(step, h0, jnp.transpose(xs, (1, 0, 2)))
        return jnp.transpose(hs, (1, 0, 2))

    fwd = gru_dir(x_seq, params["w_ih_f_T"], params["w_hh_f_T"],
                  params["b_ih_f"], params["b_hh_f"])
    bwd = gru_dir(x_seq[:, ::-1], params["w_ih_b_T"], params["w_hh_b_T"],
                  params["b_ih_b"], params["b_hh_b"])[:, ::-1]
    Y = jnp.concatenate([fwd, bwd], axis=-1)
    mean = jnp.mean(Y, axis=(0, 2), keepdims=True)
    var = jnp.mean((Y - mean) ** 2, axis=(0, 2), keepdims=True)
    Yn = (params["bn_gamma"].reshape(1, F, 1) * (Y - mean)
          * jax.lax.rsqrt(var + 1e-5) + params["bn_beta"].reshape(1, F, 1))
    return jnp.transpose(Yn, (0, 2, 1))


# ---------------------------------------------------------------------------
def init_params(key, num_f, in_dim, out_dim):
    k = 1.0 / math.sqrt(out_dim)
    keys = jax.random.split(key, 8)

    def u(kk, shape):
        return jax.random.uniform(kk, shape, jnp.float32, minval=-k, maxval=k)

    w_ih_f = u(keys[0], (3 * out_dim, in_dim))
    w_hh_f = u(keys[1], (3 * out_dim, out_dim))
    b_ih_f = u(keys[2], (3 * out_dim,))
    b_hh_f = u(keys[3], (3 * out_dim,))
    w_ih_b = u(keys[4], (3 * out_dim, in_dim))
    w_hh_b = u(keys[5], (3 * out_dim, out_dim))
    b_ih_b = u(keys[6], (3 * out_dim,))
    b_hh_b = u(keys[7], (3 * out_dim,))

    params = {
        "gcn_weight": jnp.full((1, 1), 10.0, jnp.float32),  # reset_parameters()
        # raw transposed per-direction weights (used by the JAX reference)
        "w_ih_f_T": w_ih_f.T, "w_hh_f_T": w_hh_f.T,
        "b_ih_f": b_ih_f.reshape(1, -1), "b_hh_f": b_hh_f.reshape(1, -1),
        "w_ih_b_T": w_ih_b.T, "w_hh_b_T": w_hh_b.T,
        "b_ih_b": b_ih_b.reshape(1, -1), "b_hh_b": b_hh_b.reshape(1, -1),
        "bn_gamma": jnp.ones((num_f,), jnp.float32),
        "bn_beta": jnp.zeros((num_f,), jnp.float32),
    }
    # pre-packed layouts consumed by the fused Pallas kernel
    params["w_ih_comb"] = jnp.concatenate(
        [params["w_ih_f_T"], params["w_ih_b_T"]], axis=1)          # (N, 6H)
    params["b_ih_comb"] = jnp.concatenate(
        [params["b_ih_f"], params["b_ih_b"]], axis=1)              # (1, 6H)
    params["w_hh_stk"] = jnp.concatenate(
        [params["w_hh_f_T"], params["w_hh_b_T"]], axis=1)          # (H, 6H)
    params["b_hh_2"] = jnp.concatenate(
        [params["b_hh_f"], params["b_hh_b"]], axis=0)              # (2, 3H)
    params["bn_gamma_col"] = params["bn_gamma"].reshape(num_f, 1)  # (F, 1)
    params["bn_beta_col"] = params["bn_beta"].reshape(num_f, 1)    # (F, 1)
    return params


if __name__ == "__main__":
    B, num_f, in_dim, out_dim = 2, 8, 16, 32   # num_channel unused by forward

    key = jax.random.PRNGKey(0)
    kp, kx, kh = jax.random.split(key, 3)
    params = init_params(kp, num_f, in_dim, out_dim)

    X = jax.random.normal(kx, (B, in_dim, num_f), jnp.float32)       # (B, N, F)
    Hadj = jax.random.uniform(kh, (B, in_dim, in_dim), jnp.float32)  # (B, N, N)

    out = jax.jit(stdcn_with_gru_forward)(X, Hadj, params)
    out = jax.block_until_ready(out)

    ref = reference_forward(X, Hadj, params)
    err = float(jnp.max(jnp.abs(out - ref)))
    assert out.shape == (B, 2 * out_dim, num_f), out.shape
    assert err < 5e-2, f"max abs error too large: {err}"

    print("KERNEL_OK")
</pallas_src>

<mosaic_0001>
module attributes {stable_mosaic.version = 11 : i64} {
  func.func @stdcn_gru_fused_kernel(%arg0: memref<1x1xf32, #tpu.memory_space<smem>>, %arg1: memref<2x16x16xf32, #tpu.memory_space<vmem>>, %arg2: memref<2x8x16xf32, #tpu.memory_space<vmem>>, %arg3: memref<16x192xf32, #tpu.memory_space<vmem>>, %arg4: memref<1x192xf32, #tpu.memory_space<vmem>>, %arg5: memref<32x192xf32, #tpu.memory_space<vmem>>, %arg6: memref<2x96xf32, #tpu.memory_space<vmem>>, %arg7: memref<8x1xf32, #tpu.memory_space<vmem>>, %arg8: memref<8x1xf32, #tpu.memory_space<vmem>>, %arg9: memref<8x128xf32, #tpu.memory_space<vmem>>) attributes {dimension_semantics = [], scalar_prefetch = 0 : i64, scratch_operands = 0 : i64, tpu.core_type = #tpu.core_type<tc>} {
    %c0 = arith.constant 0 : index
    %c0_0 = arith.constant 0 : index
    %0 = memref.load %arg0[%c0, %c0_0] : memref<1x1xf32, #tpu.memory_space<smem>>
    %1 = tpu.iota {dimensions = array<i32: 0>} : vector<16x16xi32>
    %2 = tpu.iota {dimensions = array<i32: 1>} : vector<16x16xi32>
    %3 = arith.cmpi eq, %1, %2 : vector<16x16xi32>
    %c0_1 = arith.constant 0 : index
    %c0_2 = arith.constant 0 : index
    %c0_3 = arith.constant 0 : index
    %4 = vector.load %arg1[%c0_1, %c0_2, %c0_3] : memref<2x16x16xf32, #tpu.memory_space<vmem>>, vector<1x16x16xf32>
    %5 = vector.shape_cast %4 : vector<1x16x16xf32> to vector<16x16xf32>
    %cst = arith.constant 1.000000e+00 : f32
    %6 = vector.broadcast %cst : f32 to vector<16x16xf32>
    %7 = arith.select %3, %6, %5 : vector<16x16xi1>, vector<16x16xf32>
    %cst_4 = arith.constant dense<0.000000e+00> : vector<16xf32>
    %8 = vector.multi_reduction <add>, %7, %cst_4 [0] : vector<16x16xf32> to vector<16xf32>
    %9 = vector.shape_cast %8 : vector<16xf32> to vector<1x16xf32>
    %10 = math.rsqrt %9 : vector<1x16xf32>
    %c0_5 = arith.constant 0 : index
    %c0_6 = arith.constant 0 : index
    %c0_7 = arith.constant 0 : index
    %11 = vector.load %arg2[%c0_5, %c0_6, %c0_7] : memref<2x8x16xf32, #tpu.memory_space<vmem>>, vector<1x8x16xf32>
    %12 = vector.shape_cast %11 : vector<1x8x16xf32> to vector<8x16xf32>
    %13 = vector.broadcast %10 : vector<1x16xf32> to vector<8x16xf32>
    %14 = arith.mulf %12, %13 : vector<8x16xf32>
    %cst_8 = arith.constant dense<0.000000e+00> : vector<8x16xf32>
    %15 = tpu.matmul %14, %7, %cst_8 {dimension_numbers = #tpu.dot_dimension_numbers<[1], [0], [0], [1], [0, 0, 1, 1], [], []>} : vector<8x16xf32>, vector<16x16xf32>, vector<8x16xf32> -> vector<8x16xf32>
    %16 = vector.broadcast %0 : f32 to vector<1x16xf32>
    %17 = arith.mulf %10, %16 : vector<1x16xf32>
    %18 = vector.broadcast %17 : vector<1x16xf32> to vector<8x16xf32>
    %19 = arith.mulf %15, %18 : vector<8x16xf32>
    %cst_9 = arith.constant 0.000000e+00 : f32
    %20 = vector.broadcast %cst_9 : f32 to vector<8x16xf32>
    %21 = arith.cmpf ogt, %19, %20 : vector<8x16xf32>
    %cst_10 = arith.constant 0.00999999977 : f32
    %22 = vector.broadcast %cst_10 : f32 to vector<8x16xf32>
    %23 = arith.mulf %22, %19 : vector<8x16xf32>
    %24 = arith.select %21, %19, %23 : vector<8x16xi1>, vector<8x16xf32>
    %c1 = arith.constant 1 : index
    %c0_11 = arith.constant 0 : index
    %c0_12 = arith.constant 0 : index
    %25 = vector.load %arg1[%c1, %c0_11, %c0_12] : memref<2x16x16xf32, #tpu.memory_space<vmem>>, vector<1x16x16xf32>
    %26 = vector.shape_cast %25 : vector<1x16x16xf32> to vector<16x16xf32>
    %cst_13 = arith.constant 1.000000e+00 : f32
    %27 = vector.broadcast %cst_13 : f32 to vector<16x16xf32>
    %28 = arith.select %3, %27, %26 : vector<16x16xi1>, vector<16x16xf32>
    %cst_14 = arith.constant dense<0.000000e+00> : vector<16xf32>
    %29 = vector.multi_reduction <add>, %28, %cst_14 [0] : vector<16x16xf32> to vector<16xf32>
    %30 = vector.shape_cast %29 : vector<16xf32> to vector<1x16xf32>
    %31 = math.rsqrt %30 : vector<1x16xf32>
    %c1_15 = arith.constant 1 : index
    %c0_16 = arith.constant 0 : index
    %c0_17 = arith.constant 0 : index
    %32 = vector.load %arg2[%c1_15, %c0_16, %c0_17] : memref<2x8x16xf32, #tpu.memory_space<vmem>>, vector<1x8x16xf32>
    %33 = vector.shape_cast %32 : vector<1x8x16xf32> to vector<8x16xf32>
    %34 = vector.broadcast %31 : vector<1x16xf32> to vector<8x16xf32>
    %35 = arith.mulf %33, %34 : vector<8x16xf32>
    %cst_18 = arith.constant dense<0.000000e+00> : vector<8x16xf32>
    %36 = tpu.matmul %35, %28, %cst_18 {dimension_numbers = #tpu.dot_dimension_numbers<[1], [0], [0], [1], [0, 0, 1, 1], [], []>} : vector<8x16xf32>, vector<16x16xf32>, vector<8x16xf32> -> vector<8x16xf32>
    %37 = vector.broadcast %0 : f32 to vector<1x16xf32>
    %38 = arith.mulf %31, %37 : vector<1x16xf32>
    %39 = vector.broadcast %38 : vector<1x16xf32> to vector<8x16xf32>
    %40 = arith.mulf %36, %39 : vector<8x16xf32>
    %cst_19 = arith.constant 0.000000e+00 : f32
    %41 = vector.broadcast %cst_19 : f32 to vector<8x16xf32>
    %42 = arith.cmpf ogt, %40, %41 : vector<8x16xf32>
    %cst_20 = arith.constant 0.00999999977 : f32
    %43 = vector.broadcast %cst_20 : f32 to vector<8x16xf32>
    %44 = arith.mulf %43, %40 : vector<8x16xf32>
    %45 = arith.select %42, %40, %44 : vector<8x16xi1>, vector<8x16xf32>
    %46 = vector.extract_strided_slice %24 {offsets = [0, 0], sizes = [1, 16], strides = [1, 1]} : vector<8x16xf32> to vector<1x16xf32>
    %47 = vector.extract_strided_slice %45 {offsets = [0, 0], sizes = [1, 16], strides = [1, 1]} : vector<8x16xf32> to vector<1x16xf32>
    %48 = vector.extract_strided_slice %24 {offsets = [7, 0], sizes = [1, 16], strides = [1, 1]} : vector<8x16xf32> to vector<1x16xf32>
    %49 = vector.extract_strided_slice %45 {offsets = [7, 0], sizes = [1, 16], strides = [1, 1]} : vector<8x16xf32> to vector<1x16xf32>
    %50 = vector.extract_strided_slice %24 {offsets = [1, 0], sizes = [1, 16], strides = [1, 1]} : vector<8x16xf32> to vector<1x16xf32>
    %51 = vector.extract_strided_slice %45 {offsets = [1, 0], sizes = [1, 16], strides = [1, 1]} : vector<8x16xf32> to vector<1x16xf32>
    %52 = vector.extract_strided_slice %24 {offsets = [6, 0], sizes = [1, 16], strides = [1, 1]} : vector<8x16xf32> to vector<1x16xf32>
    %53 = vector.extract_strided_slice %45 {offsets = [6, 0], sizes = [1, 16], strides = [1, 1]} : vector<8x16xf32> to vector<1x16xf32>
    %54 = vector.extract_strided_slice %24 {offsets = [2, 0], sizes = [1, 16], strides = [1, 1]} : vector<8x16xf32> to vector<1x16xf32>
    %55 = vector.extract_strided_slice %45 {offsets = [2, 0], sizes = [1, 16], strides = [1, 1]} : vector<8x16xf32> to vector<1x16xf32>
    %56 = vector.extract_strided_slice %24 {offsets = [5, 0], sizes = [1, 16], strides = [1, 1]} : vector<8x16xf32> to vector<1x16xf32>
    %57 = vector.extract_strided_slice %45 {offsets = [5, 0], sizes = [1, 16], strides = [1, 1]} : vector<8x16xf32> to vector<1x16xf32>
    %58 = vector.extract_strided_slice %24 {offsets = [3, 0], sizes = [1, 16], strides = [1, 1]} : vector<8x16xf32> to vector<1x16xf32>
    %59 = vector.extract_strided_slice %45 {offsets = [3, 0], sizes = [1, 16], strides = [1, 1]} : vector<8x16xf32> to vector<1x16xf32>
    %60 = vector.extract_strided_slice %24 {offsets = [4, 0], sizes = [1, 16], strides = [1, 1]} : vector<8x16xf32> to vector<1x16xf32>
    %61 = vector.extract_strided_slice %45 {offsets = [4, 0], sizes = [1, 16], strides = [1, 1]} : vector<8x16xf32> to vector<1x16xf32>
    %62 = vector.extract_strided_slice %24 {offsets = [4, 0], sizes = [1, 16], strides = [1, 1]} : vector<8x16xf32> to vector<1x16xf32>
    %63 = vector.extract_strided_slice %45 {offsets = [4, 0], sizes = [1, 16], strides = [1, 1]} : vector<8x16xf32> to vector<1x16xf32>
    %64 = vector.extract_strided_slice %24 {offsets = [3, 0], sizes = [1, 16], strides = [1, 1]} : vector<8x16xf32> to vector<1x16xf32>
    %65 = vector.extract_strided_slice %45 {offsets = [3, 0], sizes = [1, 16], strides = [1, 1]} : vector<8x16xf32> to vector<1x16xf32>
    %66 = vector.extract_strided_slice %24 {offsets = [5, 0], sizes = [1, 16], strides = [1, 1]} : vector<8x16xf32> to vector<1x16xf32>
    %67 = vector.extract_strided_slice %45 {offsets = [5, 0], sizes = [1, 16], strides = [1, 1]} : vector<8x16xf32> to vector<1x16xf32>
    %68 = vector.extract_strided_slice %24 {offsets = [2, 0], sizes = [1, 16], strides = [1, 1]} : vector<8x16xf32> to vector<1x16xf32>
    %69 = vector.extract_strided_slice %45 {offsets = [2, 0], sizes = [1, 16], strides = [1, 1]} : vector<8x16xf32> to vector<1x16xf32>
    %70 = vector.extract_strided_slice %24 {offsets = [6, 0], sizes = [1, 16], strides = [1, 1]} : vector<8x16xf32> to vector<1x16xf32>
    %71 = vector.extract_strided_slice %45 {offsets = [6, 0], sizes = [1, 16], strides = [1, 1]} : vector<8x16xf32> to vector<1x16xf32>
    %72 = vector.extract_strided_slice %24 {offsets = [1, 0], sizes = [1, 16], strides = [1, 1]} : vector<8x16xf32> to vector<1x16xf32>
    %73 = vector.extract_strided_slice %45 {offsets = [1, 0], sizes = [1, 16], strides = [1, 1]} : vector<8x16xf32> to vector<1x16xf32>
    %74 = vector.extract_strided_slice %24 {offsets = [7, 0], sizes = [1, 16], strides = [1, 1]} : vector<8x16xf32> to vector<1x16xf32>
    %75 = vector.extract_strided_slice %45 {offsets = [7, 0], sizes = [1, 16], strides = [1, 1]} : vector<8x16xf32> to vector<1x16xf32>
    %76 = vector.extract_strided_slice %24 {offsets = [0, 0], sizes = [1, 16], strides = [1, 1]} : vector<8x16xf32> to vector<1x16xf32>
    %77 = vector.extract_strided_slice %45 {offsets = [0, 0], sizes = [1, 16], strides = [1, 1]} : vector<8x16xf32> to vector<1x16xf32>
    %78 = tpu.concatenate %46, %47, %48, %49, %50, %51, %52, %53, %54, %55, %56, %57, %58, %59, %60, %61 in 0 : vector<1x16xf32>, vector<1x16xf32>, vector<1x16xf32>, vector<1x16xf32>, vector<1x16xf32>, vector<1x16xf32>, vector<1x16xf32>, vector<1x16xf32>, vector<1x16xf32>, vector<1x16xf32>, vector<1x16xf32>, vector<1x16xf32>, vector<1x16xf32>, vector<1x16xf32>, vector<1x16xf32>, vector<1x16xf32> -> vector<16x16xf32>
    %79 = tpu.concatenate %62, %63, %64, %65, %66, %67, %68, %69, %70, %71, %72, %73, %74, %75, %76, %77 in 0 : vector<1x16xf32>, vector<1x16xf32>, vector<1x16xf32>, vector<1x16xf32>, vector<1x16xf32>, vector<1x16xf32>, vector<1x16xf32>, vector<1x16xf32>, vector<1x16xf32>, vector<1x16xf32>, vector<1x16xf32>, vector<1x16xf32>, vector<1x16xf32>, vector<1x16xf32>, vector<1x16xf32>, vector<1x16xf32> -> vector<16x16xf32>
    %80 = tpu.concatenate %78, %79 in 0 : vector<16x16xf32>, vector<16x16xf32> -> vector<32x16xf32>
    %c0_21 = arith.constant 0 : index
    %c0_22 = arith.constant 0 : index
    %81 = vector.load %arg3[%c0_21, %c0_22] : memref<16x192xf32, #tpu.memory_space<vmem>>, vector<16x192xf32>
    %cst_23 = arith.constant dense<0.000000e+00> : vector<32x192xf32>
    %82 = tpu.matmul %80, %81, %cst_23 {dimension_numbers = #tpu.dot_dimension_numbers<[1], [0], [0], [1], [0, 0, 1, 1], [], []>} : vector<32x16xf32>, vector<16x192xf32>, vector<32x192xf32> -> vector<32x192xf32>
    %c0_24 = arith.constant 0 : index
    %c0_25 = arith.constant 0 : index
    %83 = vector.load %arg4[%c0_24, %c0_25] : memref<1x192xf32, #tpu.memory_space<vmem>>, vector<1x192xf32>
    %84 = vector.broadcast %83 : vector<1x192xf32> to vector<32x192xf32>
    %85 = arith.addf %82, %84 : vector<32x192xf32>
    %86 = tpu.iota {dimensions = array<i32: 0>} : vector<4x96xi32>
    %c2_i32 = arith.constant 2 : i32
    %87 = vector.broadcast %c2_i32 : i32 to vector<4x96xi32>
    %88 = arith.cmpi slt, %86, %87 : vector<4x96xi32>
    %89 = arith.extui %88 : vector<4x96xi1> to vector<4x96xi32>
    %90 = arith.sitofp %89 : vector<4x96xi32> to vector<4x96xf32>
    %cst_26 = arith.constant 1.000000e+00 : f32
    %91 = vector.broadcast %cst_26 : f32 to vector<4x96xf32>
    %92 = arith.subf %91, %90 : vector<4x96xf32>
    %93 = tpu.concatenate %90, %90, %90, %90, %90, %90, %90, %90 in 0 : vector<4x96xf32>, vector<4x96xf32>, vector<4x96xf32>, vector<4x96xf32>, vector<4x96xf32>, vector<4x96xf32>, vector<4x96xf32>, vector<4x96xf32> -> vector<32x96xf32>
    %cst_27 = arith.constant 1.000000e+00 : f32
    %94 = vector.broadcast %cst_27 : f32 to vector<32x96xf32>
    %95 = arith.subf %94, %93 : vector<32x96xf32>
    %96 = vector.extract_strided_slice %85 {offsets = [0, 0], sizes = [32, 96], strides = [1, 1]} : vector<32x192xf32> to vector<32x96xf32>
    %97 = arith.mulf %96, %93 : vector<32x96xf32>
    %98 = vector.extract_strided_slice %85 {offsets = [0, 96], sizes = [32, 96], strides = [1, 1]} : vector<32x192xf32> to vector<32x96xf32>
    %99 = arith.mulf %98, %95 : vector<32x96xf32>
    %100 = arith.addf %97, %99 : vector<32x96xf32>
    %c0_28 = arith.constant 0 : index
    %c0_29 = arith.constant 0 : index
    %101 = vector.load %arg6[%c0_28, %c0_29] : memref<2x96xf32, #tpu.memory_space<vmem>>, vector<1x96xf32>
    %102 = vector.broadcast %101 : vector<1x96xf32> to vector<4x96xf32>
    %103 = arith.mulf %102, %90 : vector<4x96xf32>
    %c1_30 = arith.constant 1 : index
    %c0_31 = arith.constant 0 : index
    %104 = vector.load %arg6[%c1_30, %c0_31] : memref<2x96xf32, #tpu.memory_space<vmem>>, vector<1x96xf32>
    %105 = vector.broadcast %104 : vector<1x96xf32> to vector<4x96xf32>
    %106 = arith.mulf %105, %92 : vector<4x96xf32>
    %107 = arith.addf %103, %106 : vector<4x96xf32>
    %c0_32 = arith.constant 0 : index
    %c0_33 = arith.constant 0 : index
    %108 = vector.load %arg5[%c0_32, %c0_33] : memref<32x192xf32, #tpu.memory_space<vmem>>, vector<32x192xf32>
    %cst_34 = arith.constant 0.000000e+00 : f32
    %109 = vector.broadcast %cst_34 : f32 to vector<4x32xf32>
    %110 = vector.extract_strided_slice %100 {offsets = [0, 0], sizes = [4, 96], strides = [1, 1]} : vector<32x96xf32> to vector<4x96xf32>
    %cst_35 = arith.constant dense<0.000000e+00> : vector<4x192xf32>
    %111 = tpu.matmul %109, %108, %cst_35 {dimension_numbers = #tpu.dot_dimension_numbers<[1], [0], [0], [1], [0, 0, 1, 1], [], []>} : vector<4x32xf32>, vector<32x192xf32>, vector<4x192xf32> -> vector<4x192xf32>
    %112 = vector.extract_strided_slice %111 {offsets = [0, 0], sizes = [4, 96], strides = [1, 1]} : vector<4x192xf32> to vector<4x96xf32>
    %113 = arith.mulf %112, %90 : vector<4x96xf32>
    %114 = vector.extract_strided_slice %111 {offsets = [0, 96], sizes = [4, 96], strides = [1, 1]} : vector<4x192xf32> to vector<4x96xf32>
    %115 = arith.mulf %114, %92 : vector<4x96xf32>
    %116 = arith.addf %113, %115 : vector<4x96xf32>
    %117 = arith.addf %116, %107 : vector<4x96xf32>
    %118 = vector.extract_strided_slice %110 {offsets = [0, 0], sizes = [4, 64], strides = [1, 1]} : vector<4x96xf32> to vector<4x64xf32>
    %119 = vector.extract_strided_slice %117 {offsets = [0, 0], sizes = [4, 64], strides = [1, 1]} : vector<4x96xf32> to vector<4x64xf32>
    %120 = arith.addf %118, %119 : vector<4x64xf32>
    %121 = arith.negf %120 : vector<4x64xf32>
    %122 = math.exp %121 : vector<4x64xf32>
    %cst_36 = arith.constant 1.000000e+00 : f32
    %123 = vector.broadcast %cst_36 : f32 to vector<4x64xf32>
    %124 = arith.addf %123, %122 : vector<4x64xf32>
    %125 = arith.divf %123, %124 : vector<4x64xf32>
    %126 = vector.extract_strided_slice %125 {offsets = [0, 0], sizes = [4, 32], strides = [1, 1]} : vector<4x64xf32> to vector<4x32xf32>
    %127 = vector.extract_strided_slice %125 {offsets = [0, 32], sizes = [4, 32], strides = [1, 1]} : vector<4x64xf32> to vector<4x32xf32>
    %128 = vector.extract_strided_slice %110 {offsets = [0, 64], sizes = [4, 32], strides = [1, 1]} : vector<4x96xf32> to vector<4x32xf32>
    %129 = vector.extract_strided_slice %117 {offsets = [0, 64], sizes = [4, 32], strides = [1, 1]} : vector<4x96xf32> to vector<4x32xf32>
    %130 = arith.mulf %126, %129 : vector<4x32xf32>
    %131 = arith.addf %128, %130 : vector<4x32xf32>
    %132 = math.tanh %131 : vector<4x32xf32>
    %cst_37 = arith.constant 1.000000e+00 : f32
    %133 = vector.broadcast %cst_37 : f32 to vector<4x32xf32>
    %134 = arith.subf %133, %127 : vector<4x32xf32>
    %135 = arith.mulf %134, %132 : vector<4x32xf32>
    %136 = arith.mulf %127, %109 : vector<4x32xf32>
    %137 = arith.addf %135, %136 : vector<4x32xf32>
    %138 = vector.extract_strided_slice %100 {offsets = [4, 0], sizes = [4, 96], strides = [1, 1]} : vector<32x96xf32> to vector<4x96xf32>
    %cst_38 = arith.constant dense<0.000000e+00> : vector<4x192xf32>
    %139 = tpu.matmul %137, %108, %cst_38 {dimension_numbers = #tpu.dot_dimension_numbers<[1], [0], [0], [1], [0, 0, 1, 1], [], []>} : vector<4x32xf32>, vector<32x192xf32>, vector<4x192xf32> -> vector<4x192xf32>
    %140 = vector.extract_strided_slice %139 {offsets = [0, 0], sizes = [4, 96], strides = [1, 1]} : vector<4x192xf32> to vector<4x96xf32>
    %141 = arith.mulf %140, %90 : vector<4x96xf32>
    %142 = vector.extract_strided_slice %139 {offsets = [0, 96], sizes = [4, 96], strides = [1, 1]} : vector<4x192xf32> to vector<4x96xf32>
    %143 = arith.mulf %142, %92 : vector<4x96xf32>
    %144 = arith.addf %141, %143 : vector<4x96xf32>
    %145 = arith.addf %144, %107 : vector<4x96xf32>
    %146 = vector.extract_strided_slice %138 {offsets = [0, 0], sizes = [4, 64], strides = [1, 1]} : vector<4x96xf32> to vector<4x64xf32>
    %147 = vector.extract_strided_slice %145 {offsets = [0, 0], sizes = [4, 64], strides = [1, 1]} : vector<4x96xf32> to vector<4x64xf32>
    %148 = arith.addf %146, %147 : vector<4x64xf32>
    %149 = arith.negf %148 : vector<4x64xf32>
    %150 = math.exp %149 : vector<4x64xf32>
    %cst_39 = arith.constant 1.000000e+00 : f32
    %151 = vector.broadcast %cst_39 : f32 to vector<4x64xf32>
    %152 = arith.addf %151, %150 : vector<4x64xf32>
    %153 = arith.divf %151, %152 : vector<4x64xf32>
    %154 = vector.extract_strided_slice %153 {offsets = [0, 0], sizes = [4, 32], strides = [1, 1]} : vector<4x64xf32> to vector<4x32xf32>
    %155 = vector.extract_strided_slice %153 {offsets = [0, 32], sizes = [4, 32], strides = [1, 1]} : vector<4x64xf32> to vector<4x32xf32>
    %156 = vector.extract_strided_slice %138 {offsets = [0, 64], sizes = [4, 32], strides = [1, 1]} : vector<4x96xf32> to vector<4x32xf32>
    %157 = vector.extract_strided_slice %145 {offsets = [0, 64], sizes = [4, 32], strides = [1, 1]} : vector<4x96xf32> to vector<4x32xf32>
    %158 = arith.mulf %154, %157 : vector<4x32xf32>
    %159 = arith.addf %156, %158 : vector<4x32xf32>
    %160 = math.tanh %159 : vector<4x32xf32>
    %cst_40 = arith.constant 1.000000e+00 : f32
    %161 = vector.broadcast %cst_40 : f32 to vector<4x32xf32>
    %162 = arith.subf %161, %155 : vector<4x32xf32>
    %163 = arith.mulf %162, %160 : vector<4x32xf32>
    %164 = arith.mulf %155, %137 : vector<4x32xf32>
    %165 = arith.addf %163, %164 : vector<4x32xf32>
    %166 = vector.extract_strided_slice %100 {offsets = [8, 0], sizes = [4, 96], strides = [1, 1]} : vector<32x96xf32> to vector<4x96xf32>
    %cst_41 = arith.constant dense<0.000000e+00> : vector<4x192xf32>
    %167 = tpu.matmul %165, %108, %cst_41 {dimension_numbers = #tpu.dot_dimension_numbers<[1], [0], [0], [1], [0, 0, 1, 1], [], []>} : vector<4x32xf32>, vector<32x192xf32>, vector<4x192xf32> -> vector<4x192xf32>
    %168 = vector.extract_strided_slice %167 {offsets = [0, 0], sizes = [4, 96], strides = [1, 1]} : vector<4x192xf32> to vector<4x96xf32>
    %169 = arith.mulf %168, %90 : vector<4x96xf32>
    %170 = vector.extract_strided_slice %167 {offsets = [0, 96], sizes = [4, 96], strides = [1, 1]} : vector<4x192xf32> to vector<4x96xf32>
    %171 = arith.mulf %170, %92 : vector<4x96xf32>
    %172 = arith.addf %169, %171 : vector<4x96xf32>
    %173 = arith.addf %172, %107 : vector<4x96xf32>
    %174 = vector.extract_strided_slice %166 {offsets = [0, 0], sizes = [4, 64], strides = [1, 1]} : vector<4x96xf32> to vector<4x64xf32>
    %175 = vector.extract_strided_slice %173 {offsets = [0, 0], sizes = [4, 64], strides = [1, 1]} : vector<4x96xf32> to vector<4x64xf32>
    %176 = arith.addf %174, %175 : vector<4x64xf32>
    %177 = arith.negf %176 : vector<4x64xf32>
    %178 = math.exp %177 : vector<4x64xf32>
    %cst_42 = arith.constant 1.000000e+00 : f32
    %179 = vector.broadcast %cst_42 : f32 to vector<4x64xf32>
    %180 = arith.addf %179, %178 : vector<4x64xf32>
    %181 = arith.divf %179, %180 : vector<4x64xf32>
    %182 = vector.extract_strided_slice %181 {offsets = [0, 0], sizes = [4, 32], strides = [1, 1]} : vector<4x64xf32> to vector<4x32xf32>
    %183 = vector.extract_strided_slice %181 {offsets = [0, 32], sizes = [4, 32], strides = [1, 1]} : vector<4x64xf32> to vector<4x32xf32>
    %184 = vector.extract_strided_slice %166 {offsets = [0, 64], sizes = [4, 32], strides = [1, 1]} : vector<4x96xf32> to vector<4x32xf32>
    %185 = vector.extract_strided_slice %173 {offsets = [0, 64], sizes = [4, 32], strides = [1, 1]} : vector<4x96xf32> to vector<4x32xf32>
    %186 = arith.mulf %182, %185 : vector<4x32xf32>
    %187 = arith.addf %184, %186 : vector<4x32xf32>
    %188 = math.tanh %187 : vector<4x32xf32>
    %cst_43 = arith.constant 1.000000e+00 : f32
    %189 = vector.broadcast %cst_43 : f32 to vector<4x32xf32>
    %190 = arith.subf %189, %183 : vector<4x32xf32>
    %191 = arith.mulf %190, %188 : vector<4x32xf32>
    %192 = arith.mulf %183, %165 : vector<4x32xf32>
    %193 = arith.addf %191, %192 : vector<4x32xf32>
    %194 = vector.extract_strided_slice %100 {offsets = [12, 0], sizes = [4, 96], strides = [1, 1]} : vector<32x96xf32> to vector<4x96xf32>
    %cst_44 = arith.constant dense<0.000000e+00> : vector<4x192xf32>
    %195 = tpu.matmul %193, %108, %cst_44 {dimension_numbers = #tpu.dot_dimension_numbers<[1], [0], [0], [1], [0, 0, 1, 1], [], []>} : vector<4x32xf32>, vector<32x192xf32>, vector<4x192xf32> -> vector<4x192xf32>
    %196 = vector.extract_strided_slice %195 {offsets = [0, 0], sizes = [4, 96], strides = [1, 1]} : vector<4x192xf32> to vector<4x96xf32>
    %197 = arith.mulf %196, %90 : vector<4x96xf32>
    %198 = vector.extract_strided_slice %195 {offsets = [0, 96], sizes = [4, 96], strides = [1, 1]} : vector<4x192xf32> to vector<4x96xf32>
    %199 = arith.mulf %198, %92 : vector<4x96xf32>
    %200 = arith.addf %197, %199 : vector<4x96xf32>
    %201 = arith.addf %200, %107 : vector<4x96xf32>
    %202 = vector.extract_strided_slice %194 {offsets = [0, 0], sizes = [4, 64], strides = [1, 1]} : vector<4x96xf32> to vector<4x64xf32>
    %203 = vector.extract_strided_slice %201 {offsets = [0, 0], sizes = [4, 64], strides = [1, 1]} : vector<4x96xf32> to vector<4x64xf32>
    %204 = arith.addf %202, %203 : vector<4x64xf32>
    %205 = arith.negf %204 : vector<4x64xf32>
    %206 = math.exp %205 : vector<4x64xf32>
    %cst_45 = arith.constant 1.000000e+00 : f32
    %207 = vector.broadcast %cst_45 : f32 to vector<4x64xf32>
    %208 = arith.addf %207, %206 : vector<4x64xf32>
    %209 = arith.divf %207, %208 : vector<4x64xf32>
    %210 = vector.extract_strided_slice %209 {offsets = [0, 0], sizes = [4, 32], strides = [1, 1]} : vector<4x64xf32> to vector<4x32xf32>
    %211 = vector.extract_strided_slice %209 {offsets = [0, 32], sizes = [4, 32], strides = [1, 1]} : vector<4x64xf32> to vector<4x32xf32>
    %212 = vector.extract_strided_slice %194 {offsets = [0, 64], sizes = [4, 32], strides = [1, 1]} : vector<4x96xf32> to vector<4x32xf32>
    %213 = vector.extract_strided_slice %201 {offsets = [0, 64], sizes = [4, 32], strides = [1, 1]} : vector<4x96xf32> to vector<4x32xf32>
    %214 = arith.mulf %210, %213 : vector<4x32xf32>
    %215 = arith.addf %212, %214 : vector<4x32xf32>
    %216 = math.tanh %215 : vector<4x32xf32>
    %cst_46 = arith.constant 1.000000e+00 : f32
    %217 = vector.broadcast %cst_46 : f32 to vector<4x32xf32>
    %218 = arith.subf %217, %211 : vector<4x32xf32>
    %219 = arith.mulf %218, %216 : vector<4x32xf32>
    %220 = arith.mulf %211, %193 : vector<4x32xf32>
    %221 = arith.addf %219, %220 : vector<4x32xf32>
    %222 = vector.extract_strided_slice %100 {offsets = [16, 0], sizes = [4, 96], strides = [1, 1]} : vector<32x96xf32> to vector<4x96xf32>
    %cst_47 = arith.constant dense<0.000000e+00> : vector<4x192xf32>
    %223 = tpu.matmul %221, %108, %cst_47 {dimension_numbers = #tpu.dot_dimension_numbers<[1], [0], [0], [1], [0, 0, 1, 1], [], []>} : vector<4x32xf32>, vector<32x192xf32>, vector<4x192xf32> -> vector<4x192xf32>
    %224 = vector.extract_strided_slice %223 {offsets = [0, 0], sizes = [4, 96], strides = [1, 1]} : vector<4x192xf32> to vector<4x96xf32>
    %225 = arith.mulf %224, %90 : vector<4x96xf32>
    %226 = vector.extract_strided_slice %223 {offsets = [0, 96], sizes = [4, 96], strides = [1, 1]} : vector<4x192xf32> to vector<4x96xf32>
    %227 = arith.mulf %226, %92 : vector<4x96xf32>
    %228 = arith.addf %225, %227 : vector<4x96xf32>
    %229 = arith.addf %228, %107 : vector<4x96xf32>
    %230 = vector.extract_strided_slice %222 {offsets = [0, 0], sizes = [4, 64], strides = [1, 1]} : vector<4x96xf32> to vector<4x64xf32>
    %231 = vector.extract_strided_slice %229 {offsets = [0, 0], sizes = [4, 64], strides = [1, 1]} : vector<4x96xf32> to vector<4x64xf32>
    %232 = arith.addf %230, %231 : vector<4x64xf32>
    %233 = arith.negf %232 : vector<4x64xf32>
    %234 = math.exp %233 : vector<4x64xf32>
    %cst_48 = arith.constant 1.000000e+00 : f32
    %235 = vector.broadcast %cst_48 : f32 to vector<4x64xf32>
    %236 = arith.addf %235, %234 : vector<4x64xf32>
    %237 = arith.divf %235, %236 : vector<4x64xf32>
    %238 = vector.extract_strided_slice %237 {offsets = [0, 0], sizes = [4, 32], strides = [1, 1]} : vector<4x64xf32> to vector<4x32xf32>
    %239 = vector.extract_strided_slice %237 {offsets = [0, 32], sizes = [4, 32], strides = [1, 1]} : vector<4x64xf32> to vector<4x32xf32>
    %240 = vector.extract_strided_slice %222 {offsets = [0, 64], sizes = [4, 32], strides = [1, 1]} : vector<4x96xf32> to vector<4x32xf32>
    %241 = vector.extract_strided_slice %229 {offsets = [0, 64], sizes = [4, 32], strides = [1, 1]} : vector<4x96xf32> to vector<4x32xf32>
    %242 = arith.mulf %238, %241 : vector<4x32xf32>
    %243 = arith.addf %240, %242 : vector<4x32xf32>
    %244 = math.tanh %243 : vector<4x32xf32>
    %cst_49 = arith.constant 1.000000e+00 : f32
    %245 = vector.broadcast %cst_49 : f32 to vector<4x32xf32>
    %246 = arith.subf %245, %239 : vector<4x32xf32>
    %247 = arith.mulf %246, %244 : vector<4x32xf32>
    %248 = arith.mulf %239, %221 : vector<4x32xf32>
    %249 = arith.addf %247, %248 : vector<4x32xf32>
    %250 = vector.extract_strided_slice %100 {offsets = [20, 0], sizes = [4, 96], strides = [1, 1]} : vector<32x96xf32> to vector<4x96xf32>
    %cst_50 = arith.constant dense<0.000000e+00> : vector<4x192xf32>
    %251 = tpu.matmul %249, %108, %cst_50 {dimension_numbers = #tpu.dot_dimension_numbers<[1], [0], [0], [1], [0, 0, 1, 1], [], []>} : vector<4x32xf32>, vector<32x192xf32>, vector<4x192xf32> -> vector<4x192xf32>
    %252 = vector.extract_strided_slice %251 {offsets = [0, 0], sizes = [4, 96], strides = [1, 1]} : vector<4x192xf32> to vector<4x96xf32>
    %253 = arith.mulf %252, %90 : vector<4x96xf32>
    %254 = vector.extract_strided_slice %251 {offsets = [0, 96], sizes = [4, 96], strides = [1, 1]} : vector<4x192xf32> to vector<4x96xf32>
    %255 = arith.mulf %254, %92 : vector<4x96xf32>
    %256 = arith.addf %253, %255 : vector<4x96xf32>
    %257 = arith.addf %256, %107 : vector<4x96xf32>
    %258 = vector.extract_strided_slice %250 {offsets = [0, 0], sizes = [4, 64], strides = [1, 1]} : vector<4x96xf32> to vector<4x64xf32>
    %259 = vector.extract_strided_slice %257 {offsets = [0, 0], sizes = [4, 64], strides = [1, 1]} : vector<4x96xf32> to vector<4x64xf32>
    %260 = arith.addf %258, %259 : vector<4x64xf32>
    %261 = arith.negf %260 : vector<4x64xf32>
    %262 = math.exp %261 : vector<4x64xf32>
    %cst_51 = arith.constant 1.000000e+00 : f32
    %263 = vector.broadcast %cst_51 : f32 to vector<4x64xf32>
    %264 = arith.addf %263, %262 : vector<4x64xf32>
    %265 = arith.divf %263, %264 : vector<4x64xf32>
    %266 = vector.extract_strided_slice %265 {offsets = [0, 0], sizes = [4, 32], strides = [1, 1]} : vector<4x64xf32> to vector<4x32xf32>
    %267 = vector.extract_strided_slice %265 {offsets = [0, 32], sizes = [4, 32], strides = [1, 1]} : vector<4x64xf32> to vector<4x32xf32>
    %268 = vector.extract_strided_slice %250 {offsets = [0, 64], sizes = [4, 32], strides = [1, 1]} : vector<4x96xf32> to vector<4x32xf32>
    %269 = vector.extract_strided_slice %257 {offsets = [0, 64], sizes = [4, 32], strides = [1, 1]} : vector<4x96xf32> to vector<4x32xf32>
    %270 = arith.mulf %266, %269 : vector<4x32xf32>
    %271 = arith.addf %268, %270 : vector<4x32xf32>
    %272 = math.tanh %271 : vector<4x32xf32>
    %cst_52 = arith.constant 1.000000e+00 : f32
    %273 = vector.broadcast %cst_52 : f32 to vector<4x32xf32>
    %274 = arith.subf %273, %267 : vector<4x32xf32>
    %275 = arith.mulf %274, %272 : vector<4x32xf32>
    %276 = arith.mulf %267, %249 : vector<4x32xf32>
    %277 = arith.addf %275, %276 : vector<4x32xf32>
    %278 = vector.extract_strided_slice %100 {offsets = [24, 0], sizes = [4, 96], strides = [1, 1]} : vector<32x96xf32> to vector<4x96xf32>
    %cst_53 = arith.constant dense<0.000000e+00> : vector<4x192xf32>
    %279 = tpu.matmul %277, %108, %cst_53 {dimension_numbers = #tpu.dot_dimension_numbers<[1], [0], [0], [1], [0, 0, 1, 1], [], []>} : vector<4x32xf32>, vector<32x192xf32>, vector<4x192xf32> -> vector<4x192xf32>
    %280 = vector.extract_strided_slice %279 {offsets = [0, 0], sizes = [4, 96], strides = [1, 1]} : vector<4x192xf32> to vector<4x96xf32>
    %281 = arith.mulf %280, %90 : vector<4x96xf32>
    %282 = vector.extract_strided_slice %279 {offsets = [0, 96], sizes = [4, 96], strides = [1, 1]} : vector<4x192xf32> to vector<4x96xf32>
    %283 = arith.mulf %282, %92 : vector<4x96xf32>
    %284 = arith.addf %281, %283 : vector<4x96xf32>
    %285 = arith.addf %284, %107 : vector<4x96xf32>
    %286 = vector.extract_strided_slice %278 {offsets = [0, 0], sizes = [4, 64], strides = [1, 1]} : vector<4x96xf32> to vector<4x64xf32>
    %287 = vector.extract_strided_slice %285 {offsets = [0, 0], sizes = [4, 64], strides = [1, 1]} : vector<4x96xf32> to vector<4x64xf32>
    %288 = arith.addf %286, %287 : vector<4x64xf32>
    %289 = arith.negf %288 : vector<4x64xf32>
    %290 = math.exp %289 : vector<4x64xf32>
    %cst_54 = arith.constant 1.000000e+00 : f32
    %291 = vector.broadcast %cst_54 : f32 to vector<4x64xf32>
    %292 = arith.addf %291, %290 : vector<4x64xf32>
    %293 = arith.divf %291, %292 : vector<4x64xf32>
    %294 = vector.extract_strided_slice %293 {offsets = [0, 0], sizes = [4, 32], strides = [1, 1]} : vector<4x64xf32> to vector<4x32xf32>
    %295 = vector.extract_strided_slice %293 {offsets = [0, 32], sizes = [4, 32], strides = [1, 1]} : vector<4x64xf32> to vector<4x32xf32>
    %296 = vector.extract_strided_slice %278 {offsets = [0, 64], sizes = [4, 32], strides = [1, 1]} : vector<4x96xf32> to vector<4x32xf32>
    %297 = vector.extract_strided_slice %285 {offsets = [0, 64], sizes = [4, 32], strides = [1, 1]} : vector<4x96xf32> to vector<4x32xf32>
    %298 = arith.mulf %294, %297 : vector<4x32xf32>
    %299 = arith.addf %296, %298 : vector<4x32xf32>
    %300 = math.tanh %299 : vector<4x32xf32>
    %cst_55 = arith.constant 1.000000e+00 : f32
    %301 = vector.broadcast %cst_55 : f32 to vector<4x32xf32>
    %302 = arith.subf %301, %295 : vector<4x32xf32>
    %303 = arith.mulf %302, %300 : vector<4x32xf32>
    %304 = arith.mulf %295, %277 : vector<4x32xf32>
    %305 = arith.addf %303, %304 : vector<4x32xf32>
    %306 = vector.extract_strided_slice %100 {offsets = [28, 0], sizes = [4, 96], strides = [1, 1]} : vector<32x96xf32> to vector<4x96xf32>
    %cst_56 = arith.constant dense<0.000000e+00> : vector<4x192xf32>
    %307 = tpu.matmul %305, %108, %cst_56 {dimension_numbers = #tpu.dot_dimension_numbers<[1], [0], [0], [1], [0, 0, 1, 1], [], []>} : vector<4x32xf32>, vector<32x192xf32>, vector<4x192xf32> -> vector<4x192xf32>
    %308 = vector.extract_strided_slice %307 {offsets = [0, 0], sizes = [4, 96], strides = [1, 1]} : vector<4x192xf32> to vector<4x96xf32>
    %309 = arith.mulf %308, %90 : vector<4x96xf32>
    %310 = vector.extract_strided_slice %307 {offsets = [0, 96], sizes = [4, 96], strides = [1, 1]} : vector<4x192xf32> to vector<4x96xf32>
    %311 = arith.mulf %310, %92 : vector<4x96xf32>
    %312 = arith.addf %309, %311 : vector<4x96xf32>
    %313 = arith.addf %312, %107 : vector<4x96xf32>
    %314 = vector.extract_strided_slice %306 {offsets = [0, 0], sizes = [4, 64], strides = [1, 1]} : vector<4x96xf32> to vector<4x64xf32>
    %315 = vector.extract_strided_slice %313 {offsets = [0, 0], sizes = [4, 64], strides = [1, 1]} : vector<4x96xf32> to vector<4x64xf32>
    %316 = arith.addf %314, %315 : vector<4x64xf32>
    %317 = arith.negf %316 : vector<4x64xf32>
    %318 = math.exp %317 : vector<4x64xf32>
    %cst_57 = arith.constant 1.000000e+00 : f32
    %319 = vector.broadcast %cst_57 : f32 to vector<4x64xf32>
    %320 = arith.addf %319, %318 : vector<4x64xf32>
    %321 = arith.divf %319, %320 : vector<4x64xf32>
    %322 = vector.extract_strided_slice %321 {offsets = [0, 0], sizes = [4, 32], strides = [1, 1]} : vector<4x64xf32> to vector<4x32xf32>
    %323 = vector.extract_strided_slice %321 {offsets = [0, 32], sizes = [4, 32], strides = [1, 1]} : vector<4x64xf32> to vector<4x32xf32>
    %324 = vector.extract_strided_slice %306 {offsets = [0, 64], sizes = [4, 32], strides = [1, 1]} : vector<4x96xf32> to vector<4x32xf32>
    %325 = vector.extract_strided_slice %313 {offsets = [0, 64], sizes = [4, 32], strides = [1, 1]} : vector<4x96xf32> to vector<4x32xf32>
    %326 = arith.mulf %322, %325 : vector<4x32xf32>
    %327 = arith.addf %324, %326 : vector<4x32xf32>
    %328 = math.tanh %327 : vector<4x32xf32>
    %cst_58 = arith.constant 1.000000e+00 : f32
    %329 = vector.broadcast %cst_58 : f32 to vector<4x32xf32>
    %330 = arith.subf %329, %323 : vector<4x32xf32>
    %331 = arith.mulf %330, %328 : vector<4x32xf32>
    %332 = arith.mulf %323, %305 : vector<4x32xf32>
    %333 = arith.addf %331, %332 : vector<4x32xf32>
    %334 = vector.extract_strided_slice %137 {offsets = [0, 0], sizes = [1, 32], strides = [1, 1]} : vector<4x32xf32> to vector<1x32xf32>
    %335 = vector.extract_strided_slice %333 {offsets = [2, 0], sizes = [1, 32], strides = [1, 1]} : vector<4x32xf32> to vector<1x32xf32>
    %336 = vector.extract_strided_slice %137 {offsets = [1, 0], sizes = [1, 32], strides = [1, 1]} : vector<4x32xf32> to vector<1x32xf32>
    %337 = vector.extract_strided_slice %333 {offsets = [3, 0], sizes = [1, 32], strides = [1, 1]} : vector<4x32xf32> to vector<1x32xf32>
    %338 = tpu.concatenate %334, %335, %336, %337 in 1 : vector<1x32xf32>, vector<1x32xf32>, vector<1x32xf32>, vector<1x32xf32> -> vector<1x128xf32>
    %339 = vector.extract_strided_slice %165 {offsets = [0, 0], sizes = [1, 32], strides = [1, 1]} : vector<4x32xf32> to vector<1x32xf32>
    %340 = vector.extract_strided_slice %305 {offsets = [2, 0], sizes = [1, 32], strides = [1, 1]} : vector<4x32xf32> to vector<1x32xf32>
    %341 = vector.extract_strided_slice %165 {offsets = [1, 0], sizes = [1, 32], strides = [1, 1]} : vector<4x32xf32> to vector<1x32xf32>
    %342 = vector.extract_strided_slice %305 {offsets = [3, 0], sizes = [1, 32], strides = [1, 1]} : vector<4x32xf32> to vector<1x32xf32>
    %343 = tpu.concatenate %339, %340, %341, %342 in 1 : vector<1x32xf32>, vector<1x32xf32>, vector<1x32xf32>, vector<1x32xf32> -> vector<1x128xf32>
    %344 = vector.extract_strided_slice %193 {offsets = [0, 0], sizes = [1, 32], strides = [1, 1]} : vector<4x32xf32> to vector<1x32xf32>
    %345 = vector.extract_strided_slice %277 {offsets = [2, 0], sizes = [1, 32], strides = [1, 1]} : vector<4x32xf32> to vector<1x32xf32>
    %346 = vector.extract_strided_slice %193 {offsets = [1, 0], sizes = [1, 32], strides = [1, 1]} : vector<4x32xf32> to vector<1x32xf32>
    %347 = vector.extract_strided_slice %277 {offsets = [3, 0], sizes = [1, 32], strides = [1, 1]} : vector<4x32xf32> to vector<1x32xf32>
    %348 = tpu.concatenate %344, %345, %346, %347 in 1 : vector<1x32xf32>, vector<1x32xf32>, vector<1x32xf32>, vector<1x32xf32> -> vector<1x128xf32>
    %349 = vector.extract_strided_slice %221 {offsets = [0, 0], sizes = [1, 32], strides = [1, 1]} : vector<4x32xf32> to vector<1x32xf32>
    %350 = vector.extract_strided_slice %249 {offsets = [2, 0], sizes = [1, 32], strides = [1, 1]} : vector<4x32xf32> to vector<1x32xf32>
    %351 = vector.extract_strided_slice %221 {offsets = [1, 0], sizes = [1, 32], strides = [1, 1]} : vector<4x32xf32> to vector<1x32xf32>
    %352 = vector.extract_strided_slice %249 {offsets = [3, 0], sizes = [1, 32], strides = [1, 1]} : vector<4x32xf32> to vector<1x32xf32>
    %353 = tpu.concatenate %349, %350, %351, %352 in 1 : vector<1x32xf32>, vector<1x32xf32>, vector<1x32xf32>, vector<1x32xf32> -> vector<1x128xf32>
    %354 = vector.extract_strided_slice %249 {offsets = [0, 0], sizes = [1, 32], strides = [1, 1]} : vector<4x32xf32> to vector<1x32xf32>
    %355 = vector.extract_strided_slice %221 {offsets = [2, 0], sizes = [1, 32], strides = [1, 1]} : vector<4x32xf32> to vector<1x32xf32>
    %356 = vector.extract_strided_slice %249 {offsets = [1, 0], sizes = [1, 32], strides = [1, 1]} : vector<4x32xf32> to vector<1x32xf32>
    %357 = vector.extract_strided_slice %221 {offsets = [3, 0], sizes = [1, 32], strides = [1, 1]} : vector<4x32xf32> to vector<1x32xf32>
    %358 = tpu.concatenate %354, %355, %356, %357 in 1 : vector<1x32xf32>, vector<1x32xf32>, vector<1x32xf32>, vector<1x32xf32> -> vector<1x128xf32>
    %359 = vector.extract_strided_slice %277 {offsets = [0, 0], sizes = [1, 32], strides = [1, 1]} : vector<4x32xf32> to vector<1x32xf32>
    %360 = vector.extract_strided_slice %193 {offsets = [2, 0], sizes = [1, 32], strides = [1, 1]} : vector<4x32xf32> to vector<1x32xf32>
    %361 = vector.extract_strided_slice %277 {offsets = [1, 0], sizes = [1, 32], strides = [1, 1]} : vector<4x32xf32> to vector<1x32xf32>
    %362 = vector.extract_strided_slice %193 {offsets = [3, 0], sizes = [1, 32], strides = [1, 1]} : vector<4x32xf32> to vector<1x32xf32>
    %363 = tpu.concatenate %359, %360, %361, %362 in 1 : vector<1x32xf32>, vector<1x32xf32>, vector<1x32xf32>, vector<1x32xf32> -> vector<1x128xf32>
    %364 = vector.extract_strided_slice %305 {offsets = [0, 0], sizes = [1, 32], strides = [1, 1]} : vector<4x32xf32> to vector<1x32xf32>
    %365 = vector.extract_strided_slice %165 {offsets = [2, 0], sizes = [1, 32], strides = [1, 1]} : vector<4x32xf32> to vector<1x32xf32>
    %366 = vector.extract_strided_slice %305 {offsets = [1, 0], sizes = [1, 32], strides = [1, 1]} : vector<4x32xf32> to vector<1x32xf32>
    %367 = vector.extract_strided_slice %165 {offsets = [3, 0], sizes = [1, 32], strides = [1, 1]} : vector<4x32xf32> to vector<1x32xf32>
    %368 = tpu.concatenate %364, %365, %366, %367 in 1 : vector<1x32xf32>, vector<1x32xf32>, vector<1x32xf32>, vector<1x32xf32> -> vector<1x128xf32>
    %369 = vector.extract_strided_slice %333 {offsets = [0, 0], sizes = [1, 32], strides = [1, 1]} : vector<4x32xf32> to vector<1x32xf32>
    %370 = vector.extract_strided_slice %137 {offsets = [2, 0], sizes = [1, 32], strides = [1, 1]} : vector<4x32xf32> to vector<1x32xf32>
    %371 = vector.extract_strided_slice %333 {offsets = [1, 0], sizes = [1, 32], strides = [1, 1]} : vector<4x32xf32> to vector<1x32xf32>
    %372 = vector.extract_strided_slice %137 {offsets = [3, 0], sizes = [1, 32], strides = [1, 1]} : vector<4x32xf32> to vector<1x32xf32>
    %373 = tpu.concatenate %369, %370, %371, %372 in 1 : vector<1x32xf32>, vector<1x32xf32>, vector<1x32xf32>, vector<1x32xf32> -> vector<1x128xf32>
    %374 = tpu.concatenate %338, %343, %348, %353, %358, %363, %368, %373 in 0 : vector<1x128xf32>, vector<1x128xf32>, vector<1x128xf32>, vector<1x128xf32>, vector<1x128xf32>, vector<1x128xf32>, vector<1x128xf32>, vector<1x128xf32> -> vector<8x128xf32>
    %cst_59 = arith.constant dense<0.000000e+00> : vector<8xf32>
    %375 = vector.multi_reduction <add>, %374, %cst_59 [1] : vector<8x128xf32> to vector<8xf32>
    %376 = vector.shape_cast %375 : vector<8xf32> to vector<8x1xf32>
    %cst_60 = arith.constant 1.280000e+02 : f32
    %377 = vector.broadcast %cst_60 : f32 to vector<8x1xf32>
    %378 = arith.divf %376, %377 : vector<8x1xf32>
    %379 = vector.broadcast %378 : vector<8x1xf32> to vector<8x128xf32>
    %380 = arith.subf %374, %379 : vector<8x128xf32>
    %381 = arith.mulf %380, %380 : vector<8x128xf32>
    %cst_61 = arith.constant dense<0.000000e+00> : vector<8xf32>
    %382 = vector.multi_reduction <add>, %381, %cst_61 [1] : vector<8x128xf32> to vector<8xf32>
    %383 = vector.shape_cast %382 : vector<8xf32> to vector<8x1xf32>
    %cst_62 = arith.constant 1.280000e+02 : f32
    %384 = vector.broadcast %cst_62 : f32 to vector<8x1xf32>
    %385 = arith.divf %383, %384 : vector<8x1xf32>
    %c0_63 = arith.constant 0 : index
    %c0_64 = arith.constant 0 : index
    %386 = vector.load %arg7[%c0_63, %c0_64] : memref<8x1xf32, #tpu.memory_space<vmem>>, vector<8x1xf32>
    %387 = vector.broadcast %386 : vector<8x1xf32> to vector<8x128xf32>
    %388 = arith.mulf %387, %380 : vector<8x128xf32>
    %cst_65 = arith.constant 9.99999974E-6 : f32
    %389 = vector.broadcast %cst_65 : f32 to vector<8x1xf32>
    %390 = arith.addf %385, %389 : vector<8x1xf32>
    %391 = math.rsqrt %390 : vector<8x1xf32>
    %392 = vector.broadcast %391 : vector<8x1xf32> to vector<8x128xf32>
    %393 = arith.mulf %388, %392 : vector<8x128xf32>
    %c0_66 = arith.constant 0 : index
    %c0_67 = arith.constant 0 : index
    %394 = vector.load %arg8[%c0_66, %c0_67] : memref<8x1xf32, #tpu.memory_space<vmem>>, vector<8x1xf32>
    %395 = vector.broadcast %394 : vector<8x1xf32> to vector<8x128xf32>
    %396 = arith.addf %393, %395 : vector<8x128xf32>
    %c0_68 = arith.constant 0 : index
    %c0_69 = arith.constant 0 : index
    %397 = vector.load %arg9[%c0_68, %c0_69] : memref<8x128xf32, #tpu.memory_space<vmem>>, vector<8x128xf32>
    tpu.vector_store %arg9[%c0_68, %c0_69], %396 {strides = array<i32>} : memref<8x128xf32, #tpu.memory_space<vmem>>, vector<8x128xf32>,
    return
  }
}

</mosaic_0001>

<llo_original>
// kernel: stdcn_with_gru_forward.1
$region0: #{stdcn_with_gru_forward.1}
  #allocation0 [shape = 'u32[]', space=smem, size = 0x4, offset = 0x4, fixed_abs, tag = 'smem constant byte address 0x4 - core index']
  #allocation1 [shape = 'u32[144,128]{1,0:T(1,128)}', space=vmem, size = 0x12000, scoped, tag = 'internal scratch']
  #allocation2 [shape = 'f32[1,1]{1,0:T(1,128)S(6)}', space=smem, size = 0x200, scoped, tag = 'scoped memory for stdcn_with_gru_forward.1']
  %s0 = inlined_call_operand.<no memory space> [shape: f32[1,1], index: 0, kind: input, shape index: {}]
  %s1 = inlined_call_operand.vmem [shape: f32[2,16,16], index: 1, kind: input, shape index: {}]
  %s2 = inlined_call_operand.vmem [shape: f32[2,8,16], index: 2, kind: input, shape index: {}]
  %s3 = inlined_call_operand.vmem [shape: f32[16,192], index: 3, kind: input, shape index: {}]
  %s4 = inlined_call_operand.vmem [shape: f32[1,192], index: 4, kind: input, shape index: {}]
  %s5 = inlined_call_operand.vmem [shape: f32[32,192], index: 5, kind: input, shape index: {}]
  %s6 = inlined_call_operand.vmem [shape: f32[2,96], index: 6, kind: input, shape index: {}]
  %s7 = inlined_call_operand.vmem [shape: f32[8,1], index: 7, kind: input, shape index: {}]
  %s8 = inlined_call_operand.vmem [shape: f32[8,1], index: 8, kind: input, shape index: {}]
  %s9 = inlined_call_operand.vmem [shape: f32[8,128], index: 9, kind: output, shape index: {}]
  %s10 = sld [smem:[#allocation0]]
  $region46: #{stdcn_with_gru_forward.1} parent=0
    _
  %s12 = ssub.s32 1, %s10
  %s13 = scalar_select 0, %s12, %s10
  %14 = sst [smem:[#allocation2]] %s0
  // Predicated region
  $region2: #{stdcn_with_gru_forward.1} parent=0 // pred_check
    _
  $region3: #{stdcn_with_gru_forward.1} parent=0 // pred_check_branch
    %16 = sbr.rel (0) target = $region5
  $region4: #{stdcn_with_gru_forward.1} parent=0 // pred_region
    _
  $region5: #{stdcn_with_gru_forward.1} parent=0 // pred_fallthru
    _
  // Predicated region
  $region6: #{stdcn_with_gru_forward.1} parent=0 // pred_check
    _
  $region7: #{stdcn_with_gru_forward.1} parent=0 // pred_check_branch
    %18 = sbr.rel (0) target = $region9
  $region8: #{stdcn_with_gru_forward.1} parent=0 // pred_region
    _
  $region9: #{stdcn_with_gru_forward.1} parent=0 // pred_fallthru
    _
  // Predicated region
  $region10: #{stdcn_with_gru_forward.1} parent=0 // pred_check
    _
  $region11: #{stdcn_with_gru_forward.1} parent=0 // pred_check_branch
    %20 = sbr.rel (0) target = $region13
  $region12: #{stdcn_with_gru_forward.1} parent=0 // pred_region
    _
  $region13: #{stdcn_with_gru_forward.1} parent=0 // pred_fallthru
    _
  // Predicated region
  $region14: #{stdcn_with_gru_forward.1} parent=0 // pred_check
    _
  $region15: #{stdcn_with_gru_forward.1} parent=0 // pred_check_branch
    %22 = sbr.rel (0) target = $region17
  $region16: #{stdcn_with_gru_forward.1} parent=0 // pred_region
    _
  $region17: #{stdcn_with_gru_forward.1} parent=0 // pred_fallthru
    _
  // Predicated region
  $region18: #{stdcn_with_gru_forward.1} parent=0 // pred_check
    _
  $region19: #{stdcn_with_gru_forward.1} parent=0 // pred_check_branch
    %24 = sbr.rel (0) target = $region21
  $region20: #{stdcn_with_gru_forward.1} parent=0 // pred_region
    _
  $region21: #{stdcn_with_gru_forward.1} parent=0 // pred_fallthru
    _
  // Predicated region
  $region22: #{stdcn_with_gru_forward.1} parent=0 // pred_check
    _
  $region23: #{stdcn_with_gru_forward.1} parent=0 // pred_check_branch
    %26 = sbr.rel (0) target = $region25
  $region24: #{stdcn_with_gru_forward.1} parent=0 // pred_region
    _
  $region25: #{stdcn_with_gru_forward.1} parent=0 // pred_fallthru
    _
  // Predicated region
  $region26: #{stdcn_with_gru_forward.1} parent=0 // pred_check
    _
  $region27: #{stdcn_with_gru_forward.1} parent=0 // pred_check_branch
    %28 = sbr.rel (0) target = $region29
  $region28: #{stdcn_with_gru_forward.1} parent=0 // pred_region
    _
  $region29: #{stdcn_with_gru_forward.1} parent=0 // pred_fallthru
    _
  // Predicated region
  $region30: #{stdcn_with_gru_forward.1} parent=0 // pred_check
    _
  $region31: #{stdcn_with_gru_forward.1} parent=0 // pred_check_branch
    %30 = sbr.rel (0) target = $region33
  $region32: #{stdcn_with_gru_forward.1} parent=0 // pred_region
    _
  $region33: #{stdcn_with_gru_forward.1} parent=0 // pred_fallthru
    _
  // Predicated region
  $region34: #{stdcn_with_gru_forward.1} parent=0 // pred_check
    _
  $region35: #{stdcn_with_gru_forward.1} parent=0 // pred_check_branch
    %32 = sbr.rel (0) target = $region37
  $region36: #{stdcn_with_gru_forward.1} parent=0 // pred_region
    _
  $region37: #{stdcn_with_gru_forward.1} parent=0 // pred_fallthru
    _
  %s33 = sld [smem:[#allocation2]]
  %v34 = vlaneseq
  %v35 = vshrl.u32 %v34, 7
  %v36 = vadd.s32 %v35, 8
  %v37 = vlaneseq
  %v38 = vand.u32 %v37, 127
  %vm39 = vcmp.eq.s32.totalorder %v35, %v38
  %vm40 = vcmp.eq.s32.totalorder %v36, %v38
  %v41 = vld [vmem:[%s1] sm:$0xff]
  %v42 = vld [vmem:[%s1 + $0x8] sm:$0xff]
  %v43 = vsel %vm39, 1.0, %v41
  %v44 = vsel %vm40, 1.0, %v42
  %vm45 = vcmask 130048
  %v46 = vsel %vm45, %v43, 0.0
  %v47 = vsel %vm45, %v44, 0.0
  %v48 = vadd.f32 %v46, %v47
  %v49 = vrot.slane %v48, 4
  %v50 = vadd.f32 %v48, %v49
  %v51 = vrot.slane %v50, 2
  %v52 = vadd.f32 %v50, %v51
  %v53 = vrot.slane %v52, 1
  %v54 = vadd.f32 %v52, %v53
  %v55 = vrsqrt.pop %v54
  %v56 = vld [vmem:[%s2] sm:$0xff]
  %v57 = vmul.f32 %v56, %v55
  %v59 = vsel %vm45, %v57, 0
  %61 = vmatprep.subr.mxu0 0.0
  %62 = vmatpush1.msra.mxu0 %v43
  %63 = vmatprep.subr.mxu0 0.0
  %64 = vmatpush1.msra.mxu0 %v44
  %65 = vmatprep.subr.mxu0 0.0
  %66 = vmatpush1.msra.mxu0 0.0
  %67 = vmatprep.subr.mxu0 0.0
  %68 = vmatpush1.msra.mxu0 0.0
  %69 = vmatprep.subr.mxu0 0.0
  %70 = vmatpush1.msra.mxu0 0.0
  %71 = vmatprep.subr.mxu0 0.0
  %72 = vmatpush1.msra.mxu0 0.0
  %73 = vmatprep.subr.mxu0 0.0
  %74 = vmatpush1.msra.mxu0 0.0
  %75 = vmatprep.subr.mxu0 0.0
  %76 = vmatpush1.msra.mxu0 0.0
  %77 = vmatprep.subr.mxu0 0.0
  %78 = vmatpush1.msra.mxu0 0.0
  %79 = vmatprep.subr.mxu0 0.0
  %80 = vmatpush1.msra.mxu0 0.0
  %81 = vmatprep.subr.mxu0 0.0
  %82 = vmatpush1.msra.mxu0 0.0
  %83 = vmatprep.subr.mxu0 0.0
  %84 = vmatpush1.msra.mxu0 0.0
  %85 = vmatprep.subr.mxu0 0.0
  %86 = vmatpush1.msra.mxu0 0.0
  %87 = vmatprep.subr.mxu0 0.0
  %88 = vmatpush1.msra.mxu0 0.0
  %89 = vmatprep.subr.mxu0 0.0
  %90 = vmatpush1.msra.mxu0 0.0
  %91 = vmatprep.subr.mxu0 0.0
  %92 = vmatpush1.msra.mxu0 0.0
  %93 = vmatprep.subr.mxu0 0.0
  %94 = vmatpush1.msra.mxu0 0.0
  %95 = vmatprep.subr.mxu0 0.0
  %96 = vmatpush1.msra.mxu0 0.0
  %97 = vmatprep.subr.mxu0 0.0
  %98 = vmatpush1.msra.mxu0 0.0
  %99 = vmatprep.subr.mxu0 0.0
  %100 = vmatpush1.msra.mxu0 0.0
  %101 = vmatprep.subr.mxu0 0.0
  %102 = vmatpush1.msra.mxu0 0.0
  %103 = vmatprep.subr.mxu0 0.0
  %104 = vmatpush1.msra.mxu0 0.0
  %105 = vmatprep.subr.mxu0 0.0
  %106 = vmatpush1.msra.mxu0 0.0
  %107 = vmatprep.subr.mxu0 0.0
  %108 = vmatpush1.msra.mxu0 0.0
  %109 = vmatprep.subr.mxu0 0.0
  %110 = vmatpush1.msra.mxu0 0.0
  %111 = vmatprep.subr.mxu0 0.0
  %112 = vmatpush1.msra.mxu0 0.0
  %113 = vmatprep.subr.mxu0 0.0
  %114 = vmatpush1.msra.mxu0 0.0
  %115 = vmatprep.subr.mxu0 0.0
  %116 = vmatpush1.msra.mxu0 0.0
  %117 = vmatprep.subr.mxu0 0.0
  %118 = vmatpush1.msra.mxu0 0.0
  %119 = vmatprep.subr.mxu0 0.0
  %120 = vmatpush1.msra.mxu0 0.0
  %121 = vmatprep.subr.mxu0 0.0
  %122 = vmatpush1.msra.mxu0 0.0
  %123 = vmatprep.subr.mxu0 0.0
  %124 = vmatpush1.msra.mxu0 0.0
  %125 = vmatprep.mubr.f32.mxu0 0.0
  %126 = vmatmul.mubr.f32.gmra.mrb[0].mxu0 %v59
  %v127 = vpop.f32.mrb[0].mxu0
  %v128 = vadd.f32 0.0, %v127
  %v129 = vpop.f32.mrb[0].mxu0
  %130 = vdwg.mxu0
  %v131 = vstv %s33
  %v132 = vmul.f32 %v55, %v131
  %v133 = vmul.f32 %v128, %v132
  %vm134 = vcmp.gt.f32.partialorder %v133, 0.0
  %v135 = vmul.f32 %v133, 0.01
  %v136 = vsel %vm134, %v133, %v135
  %s137 = scalar_lea.vmem %s1, 16
  %v138 = vld [vmem:[%s137] sm:$0xff]
  %v139 = vld [vmem:[%s137 + $0x8] sm:$0xff]
  %v140 = vsel %vm39, 1.0, %v138
  %v141 = vsel %vm40, 1.0, %v139
  %v142 = vsel %vm45, %v140, 0.0
  %v143 = vsel %vm45, %v141, 0.0
  %v144 = vadd.f32 %v142, %v143
  %v145 = vrot.slane %v144, 4
  %v146 = vadd.f32 %v144, %v145
  %v147 = vrot.slane %v146, 2
  %v148 = vadd.f32 %v146, %v147
  %v149 = vrot.slane %v148, 1
  %v150 = vadd.f32 %v148, %v149
  %v151 = vrsqrt.pop %v150
  %s152 = scalar_lea.vmem %s2, 8
  %v153 = vld [vmem:[%s152] sm:$0xff]
  %v154 = vmul.f32 %v153, %v151
  %v156 = vsel %vm45, %v154, 0
  %158 = vmatprep.subr.mxu0 0.0
  %159 = vmatpush1.msra.mxu0 %v140
  %160 = vmatprep.subr.mxu0 0.0
  %161 = vmatpush1.msra.mxu0 %v141
  %162 = vmatprep.subr.mxu0 0.0
  %163 = vmatpush1.msra.mxu0 0.0
  %164 = vmatprep.subr.mxu0 0.0
  %165 = vmatpush1.msra.mxu0 0.0
  %166 = vmatprep.subr.mxu0 0.0
  %167 = vmatpush1.msra.mxu0 0.0
  %168 = vmatprep.subr.mxu0 0.0
  %169 = vmatpush1.msra.mxu0 0.0
  %170 = vmatprep.subr.mxu0 0.0
  %171 = vmatpush1.msra.mxu0 0.0
  %172 = vmatprep.subr.mxu0 0.0
  %173 = vmatpush1.msra.mxu0 0.0
  %174 = vmatprep.subr.mxu0 0.0
  %175 = vmatpush1.msra.mxu0 0.0
  %176 = vmatprep.subr.mxu0 0.0
  %177 = vmatpush1.msra.mxu0 0.0
  %178 = vmatprep.subr.mxu0 0.0
  %179 = vmatpush1.msra.mxu0 0.0
  %180 = vmatprep.subr.mxu0 0.0
  %181 = vmatpush1.msra.mxu0 0.0
  %182 = vmatprep.subr.mxu0 0.0
  %183 = vmatpush1.msra.mxu0 0.0
  %184 = vmatprep.subr.mxu0 0.0
  %185 = vmatpush1.msra.mxu0 0.0
  %186 = vmatprep.subr.mxu0 0.0
  %187 = vmatpush1.msra.mxu0 0.0
  %188 = vmatprep.subr.mxu0 0.0
  %189 = vmatpush1.msra.mxu0 0.0
  %190 = vmatprep.subr.mxu0 0.0
  %191 = vmatpush1.msra.mxu0 0.0
  %192 = vmatprep.subr.mxu0 0.0
  %193 = vmatpush1.msra.mxu0 0.0
  %194 = vmatprep.subr.mxu0 0.0
  %195 = vmatpush1.msra.mxu0 0.0
  %196 = vmatprep.subr.mxu0 0.0
  %197 = vmatpush1.msra.mxu0 0.0
  %198 = vmatprep.subr.mxu0 0.0
  %199 = vmatpush1.msra.mxu0 0.0
  %200 = vmatprep.subr.mxu0 0.0
  %201 = vmatpush1.msra.mxu0 0.0
  %202 = vmatprep.subr.mxu0 0.0
  %203 = vmatpush1.msra.mxu0 0.0
  %204 = vmatprep.subr.mxu0 0.0
  %205 = vmatpush1.msra.mxu0 0.0
  %206 = vmatprep.subr.mxu0 0.0
  %207 = vmatpush1.msra.mxu0 0.0
  %208 = vmatprep.subr.mxu0 0.0
  %209 = vmatpush1.msra.mxu0 0.0
  %210 = vmatprep.subr.mxu0 0.0
  %211 = vmatpush1.msra.mxu0 0.0
  %212 = vmatprep.subr.mxu0 0.0
  %213 = vmatpush1.msra.mxu0 0.0
  %214 = vmatprep.subr.mxu0 0.0
  %215 = vmatpush1.msra.mxu0 0.0
  %216 = vmatprep.subr.mxu0 0.0
  %217 = vmatpush1.msra.mxu0 0.0
  %218 = vmatprep.subr.mxu0 0.0
  %219 = vmatpush1.msra.mxu0 0.0
  %220 = vmatprep.subr.mxu0 0.0
  %221 = vmatpush1.msra.mxu0 0.0
  %222 = vmatprep.mubr.f32.mxu0 0.0
  %223 = vmatmul.mubr.f32.gmra.mrb[0].mxu0 %v156
  %v224 = vpop.f32.mrb[0].mxu0
  %v225 = vadd.f32 0.0, %v224
  %v226 = vpop.f32.mrb[0].mxu0
  %227 = vdwg.mxu0
  %v228 = vmul.f32 %v151, %v131
  %v229 = vmul.f32 %v225, %v228
  %vm230 = vcmp.gt.f32.partialorder %v229, 0.0
  %v231 = vmul.f32 %v229, 0.01
  %v232 = vsel %vm230, %v229, %v231
  %v234 = vrot.slane %v232, 7
  %v237 = vrot.slane %v136, 5
  %v239 = vrot.slane %v232, 4
  %v241 = vrot.slane %v136, 2
  %v243 = vrot.slane %v232, 1
  %v245 = vrot.slane %v136, 3
  %v247 = vrot.slane %v232, 2
  %v249 = vrot.slane %v136, 7
  %v251 = vrot.slane %v232, 6
  %v253 = vrot.slane %v136, 6
  %v255 = vrot.slane %v232, 5
  %vm257 = vcmask 1040384
  %v258 = vsel %vm257, %v136, %v234
  %vm259 = vcmask 1041408
  %v260 = vsel %vm259, %v258, %v237
  %vm261 = vcmask 1042432
  %v262 = vsel %vm261, %v260, %v239
  %vm263 = vcmask 1043456
  %v264 = vsel %vm263, %v262, %v237
  %vm265 = vcmask 1044480
  %v266 = vsel %vm265, %v264, %v239
  %vm267 = vcmask 1045504
  %v268 = vsel %vm267, %v266, %v136
  %vm269 = vcmask 1046528
  %v270 = vsel %vm269, %v268, %v234
  %v271 = vsel %vm257, %v241, %v243
  %v272 = vsel %vm259, %v271, %v245
  %v273 = vsel %vm261, %v272, %v247
  %v274 = vsel %vm263, %v273, %v249
  %v275 = vsel %vm265, %v274, %v251
  %v276 = vsel %vm267, %v275, %v253
  %v277 = vsel %vm269, %v276, %v255
  %v278 = vrot.slane %v136, 4
  %v280 = vrot.slane %v232, 3
  %v282 = vrot.slane %v136, 1
  %v284 = vsel %vm257, %v278, %v280
  %v285 = vsel %vm259, %v284, %v282
  %v286 = vsel %vm261, %v285, %v232
  %v287 = vsel %vm263, %v286, %v282
  %v288 = vsel %vm265, %v287, %v232
  %v289 = vsel %vm267, %v288, %v278
  %v290 = vsel %vm269, %v289, %v280
  %v291 = vsel %vm257, %v253, %v255
  %v292 = vsel %vm259, %v291, %v249
  %v293 = vsel %vm261, %v292, %v251
  %v294 = vsel %vm263, %v293, %v245
  %v295 = vsel %vm265, %v294, %v247
  %v296 = vsel %vm267, %v295, %v241
  %v297 = vsel %vm269, %v296, %v243
  %v298 = vld [vmem:[%s3] sm:$0xff]
  %v299 = vld [vmem:[%s3 + $0x8] sm:$0xff]
  %v300 = vld [vmem:[%s3 + $0x10] sm:$0xff]
  %v301 = vld [vmem:[%s3 + $0x18] sm:$0xff]
  %v302 = vld [vmem:[%s4] sm:$0x3]
  %v304 = vlaneseq
  %v305 = vshrl.u32 %v304, 7
  %v306 = vsub.s32 0, %v305
  %v307 = vrot.slane %v302, %v306
  %v308 = vlaneseq
  %v309 = vshrl.u32 %v308, 7
  %v310 = vsub.s32 1, %v309
  %v311 = vrot.slane %v302, %v310
  %v315 = vsel %vm45, %v270, 0
  %v318 = vsel %vm45, %v277, 0
  %v321 = vsel %vm45, %v290, 0
  %v324 = vsel %vm45, %v297, 0
  %326 = vmatprep.subr.mxu0 %v299
  %327 = vmatpush1.msra.mxu0 %v298
  %328 = vmatprep.subr.mxu0 %v301
  %329 = vmatpush1.msra.mxu0 %v300
  %330 = vmatprep.subr.mxu0 0.0
  %331 = vmatpush1.msra.mxu0 0.0
  %332 = vmatprep.subr.mxu0 0.0
  %333 = vmatpush1.msra.mxu0 0.0
  %334 = vmatprep.subr.mxu0 0.0
  %335 = vmatpush1.msra.mxu0 0.0
  %336 = vmatprep.subr.mxu0 0.0
  %337 = vmatpush1.msra.mxu0 0.0
  %338 = vmatprep.subr.mxu0 0.0
  %339 = vmatpush1.msra.mxu0 0.0
  %340 = vmatprep.subr.mxu0 0.0
  %341 = vmatpush1.msra.mxu0 0.0
  %342 = vmatprep.subr.mxu0 0.0
  %343 = vmatpush1.msra.mxu0 0.0
  %344 = vmatprep.subr.mxu0 0.0
  %345 = vmatpush1.msra.mxu0 0.0
  %346 = vmatprep.subr.mxu0 0.0
  %347 = vmatpush1.msra.mxu0 0.0
  %348 = vmatprep.subr.mxu0 0.0
  %349 = vmatpush1.msra.mxu0 0.0
  %350 = vmatprep.subr.mxu0 0.0
  %351 = vmatpush1.msra.mxu0 0.0
  %352 = vmatprep.subr.mxu0 0.0
  %353 = vmatpush1.msra.mxu0 0.0
  %354 = vmatprep.subr.mxu0 0.0
  %355 = vmatpush1.msra.mxu0 0.0
  %356 = vmatprep.subr.mxu0 0.0
  %357 = vmatpush1.msra.mxu0 0.0
  %358 = vmatprep.subr.mxu0 0.0
  %359 = vmatpush1.msra.mxu0 0.0
  %360 = vmatprep.subr.mxu0 0.0
  %361 = vmatpush1.msra.mxu0 0.0
  %362 = vmatprep.subr.mxu0 0.0
  %363 = vmatpush1.msra.mxu0 0.0
  %364 = vmatprep.subr.mxu0 0.0
  %365 = vmatpush1.msra.mxu0 0.0
  %366 = vmatprep.subr.mxu0 0.0
  %367 = vmatpush1.msra.mxu0 0.0
  %368 = vmatprep.subr.mxu0 0.0
  %369 = vmatpush1.msra.mxu0 0.0
  %370 = vmatprep.subr.mxu0 0.0
  %371 = vmatpush1.msra.mxu0 0.0
  %372 = vmatprep.subr.mxu0 0.0
  %373 = vmatpush1.msra.mxu0 0.0
  %374 = vmatprep.subr.mxu0 0.0
  %375 = vmatpush1.msra.mxu0 0.0
  %376 = vmatprep.subr.mxu0 0.0
  %377 = vmatpush1.msra.mxu0 0.0
  %378 = vmatprep.subr.mxu0 0.0
  %379 = vmatpush1.msra.mxu0 0.0
  %380 = vmatprep.subr.mxu0 0.0
  %381 = vmatpush1.msra.mxu0 0.0
  %382 = vmatprep.subr.mxu0 0.0
  %383 = vmatpush1.msra.mxu0 0.0
  %384 = vmatprep.subr.mxu0 0.0
  %385 = vmatpush1.msra.mxu0 0.0
  %386 = vmatprep.subr.mxu0 0.0
  %387 = vmatpush1.msra.mxu0 0.0
  %388 = vmatprep.subr.mxu0 0.0
  %389 = vmatpush1.msra.mxu0 0.0
  %390 = vmatprep.mubr.f32.mxu0 0.0
  %391 = vmatmul.mubr.f32.gmra.mrb[0].mxu0 %v315
  %v392 = vpop.f32.mrb[0].mxu0
  %v393 = vadd.f32 %v307, %v392
  %v394 = vpop.f32.mrb[0].mxu0
  %v395 = vadd.f32 %v311, %v394
  %396 = vmatprep.mubr.f32.mxu0 0.0
  %397 = vmatmul.mubr.f32.gmra.mrb[0].mxu0 %v318
  %v398 = vpop.f32.mrb[0].mxu0
  %v399 = vadd.f32 %v307, %v398
  %v400 = vpop.f32.mrb[0].mxu0
  %v401 = vadd.f32 %v311, %v400
  %402 = vmatprep.mubr.f32.mxu0 0.0
  %403 = vmatmul.mubr.f32.gmra.mrb[0].mxu0 %v321
  %v404 = vpop.f32.mrb[0].mxu0
  %v405 = vadd.f32 %v307, %v404
  %v406 = vpop.f32.mrb[0].mxu0
  %v407 = vadd.f32 %v311, %v406
  %408 = vmatprep.mubr.f32.mxu0 0.0
  %409 = vmatmul.mubr.f32.gmra.mrb[0].mxu0 %v324
  %v410 = vpop.f32.mrb[0].mxu0
  %v411 = vadd.f32 %v307, %v410
  %v412 = vpop.f32.mrb[0].mxu0
  %v413 = vadd.f32 %v311, %v412
  %414 = vdwg.mxu0
  %vm415 = vcmp.lt.s32.totalorder %v35, 2
  %v416 = vsel %vm415, 1, 0
  %v417 = vcvt.s32.f32 %v416
  %v418 = vsub.f32 1.0, %v417
  %v420 = vrot.slane %v417, 4
  %v422 = vsel %vm263, %v417, %v420
  %v423 = vsub.f32 1.0, %v422
  %v424 = vmul.f32 %v393, %v422
  %v425 = vmul.f32 %v399, %v422
  %v426 = vmul.f32 %v405, %v422
  %v427 = vmul.f32 %v411, %v422
  %429 = vrot.lane.b32.xlu0 %v423, 96
  %v430 = vpop.permute.xlu0 %429
  %v432 = vmul.f32 %v393, %v430
  %v433 = vmul.f32 %v395, %v430
  %v434 = vmul.f32 %v399, %v430
  %v435 = vmul.f32 %v401, %v430
  %v436 = vmul.f32 %v405, %v430
  %v437 = vmul.f32 %v407, %v430
  %v438 = vmul.f32 %v411, %v430
  %v439 = vmul.f32 %v413, %v430
  %448 = vrot.lane.b32.xlu0 %v432, 32
  %v449 = vpop.permute.xlu0 %448
  %450 = vrot.lane.b32.xlu0 %v433, 32
  %v451 = vpop.permute.xlu0 %450
  %452 = vrot.lane.b32.xlu0 %v434, 32
  %v453 = vpop.permute.xlu0 %452
  %454 = vrot.lane.b32.xlu0 %v435, 32
  %v455 = vpop.permute.xlu0 %454
  %456 = vrot.lane.b32.xlu0 %v436, 32
  %v457 = vpop.permute.xlu0 %456
  %458 = vrot.lane.b32.xlu0 %v437, 32
  %v459 = vpop.permute.xlu0 %458
  %460 = vrot.lane.b32.xlu0 %v438, 32
  %v461 = vpop.permute.xlu0 %460
  %462 = vrot.lane.b32.xlu0 %v439, 32
  %v463 = vpop.permute.xlu0 %462
  %vm464 = vcmask 261120
  %v465 = vsel %vm464, %v449, %v451
  %v466 = vsel %vm464, %v453, %v455
  %v467 = vsel %vm464, %v457, %v459
  %v468 = vsel %vm464, %v461, %v463
  %v473 = vadd.f32 %v424, %v465
  %v474 = vadd.f32 %v425, %v466
  %v475 = vadd.f32 %v426, %v467
  %v476 = vadd.f32 %v427, %v468
  %v477 = vld [vmem:[%s6] sm:$0x1]
  %v478 = vlaneseq
  %v479 = vshrl.u32 %v478, 7
  %v480 = vsub.s32 0, %v479
  %v481 = vrot.slane %v477, %v480
  %v482 = vmul.f32 %v481, %v417
  %v483 = vld [vmem:[%s6 + $0x1] sm:$0x1]
  %v484 = vlaneseq
  %v485 = vshrl.u32 %v484, 7
  %v486 = vsub.s32 0, %v485
  %v487 = vrot.slane %v483, %v486
  %v488 = vmul.f32 %v487, %v418
  %v489 = vadd.f32 %v482, %v488
  %v490 = vld [vmem:[%s5] sm:$0xff]
  %v491 = vld [vmem:[%s5 + $0x8] sm:$0xff]
  %v492 = vld [vmem:[%s5 + $0x10] sm:$0xff]
  %v493 = vld [vmem:[%s5 + $0x18] sm:$0xff]
  %v494 = vld [vmem:[%s5 + $0x20] sm:$0xff]
  %v495 = vld [vmem:[%s5 + $0x28] sm:$0xff]
  %v496 = vld [vmem:[%s5 + $0x30] sm:$0xff]
  %v497 = vld [vmem:[%s5 + $0x38] sm:$0xff]
  %v499 = vsel %vm464, 0.0, 0
  %501 = vmatprep.subr.mxu0 %v491
  %502 = vmatpush1.msra.mxu0 %v490
  %503 = vmatprep.subr.mxu0 %v493
  %504 = vmatpush1.msra.mxu0 %v492
  %505 = vmatprep.subr.mxu0 %v495
  %506 = vmatpush1.msra.mxu0 %v494
  %507 = vmatprep.subr.mxu0 %v497
  %508 = vmatpush1.msra.mxu0 %v496
  %509 = vmatprep.subr.mxu0 0.0
  %510 = vmatpush1.msra.mxu0 0.0
  %511 = vmatprep.subr.mxu0 0.0
  %512 = vmatpush1.msra.mxu0 0.0
  %513 = vmatprep.subr.mxu0 0.0
  %514 = vmatpush1.msra.mxu0 0.0
  %515 = vmatprep.subr.mxu0 0.0
  %516 = vmatpush1.msra.mxu0 0.0
  %517 = vmatprep.subr.mxu0 0.0
  %518 = vmatpush1.msra.mxu0 0.0
  %519 = vmatprep.subr.mxu0 0.0
  %520 = vmatpush1.msra.mxu0 0.0
  %521 = vmatprep.subr.mxu0 0.0
  %522 = vmatpush1.msra.mxu0 0.0
  %523 = vmatprep.subr.mxu0 0.0
  %524 = vmatpush1.msra.mxu0 0.0
  %525 = vmatprep.subr.mxu0 0.0
  %526 = vmatpush1.msra.mxu0 0.0
  %527 = vmatprep.subr.mxu0 0.0
  %528 = vmatpush1.msra.mxu0 0.0
  %529 = vmatprep.subr.mxu0 0.0
  %530 = vmatpush1.msra.mxu0 0.0
  %531 = vmatprep.subr.mxu0 0.0
  %532 = vmatpush1.msra.mxu0 0.0
  %533 = vmatprep.subr.mxu0 0.0
  %534 = vmatpush1.msra.mxu0 0.0
  %535 = vmatprep.subr.mxu0 0.0
  %536 = vmatpush1.msra.mxu0 0.0
  %537 = vmatprep.subr.mxu0 0.0
  %538 = vmatpush1.msra.mxu0 0.0
  %539 = vmatprep.subr.mxu0 0.0
  %540 = vmatpush1.msra.mxu0 0.0
  %541 = vmatprep.subr.mxu0 0.0
  %542 = vmatpush1.msra.mxu0 0.0
  %543 = vmatprep.subr.mxu0 0.0
  %544 = vmatpush1.msra.mxu0 0.0
  %545 = vmatprep.subr.mxu0 0.0
  %546 = vmatpush1.msra.mxu0 0.0
  %547 = vmatprep.subr.mxu0 0.0
  %548 = vmatpush1.msra.mxu0 0.0
  %549 = vmatprep.subr.mxu0 0.0
  %550 = vmatpush1.msra.mxu0 0.0
  %551 = vmatprep.subr.mxu0 0.0
  %552 = vmatpush1.msra.mxu0 0.0
  %553 = vmatprep.subr.mxu0 0.0
  %554 = vmatpush1.msra.mxu0 0.0
  %555 = vmatprep.subr.mxu0 0.0
  %556 = vmatpush1.msra.mxu0 0.0
  %557 = vmatprep.subr.mxu0 0.0
  %558 = vmatpush1.msra.mxu0 0.0
  %559 = vmatprep.subr.mxu0 0.0
  %560 = vmatpush1.msra.mxu0 0.0
  %561 = vmatprep.subr.mxu0 0.0
  %562 = vmatpush1.msra.mxu0 0.0
  %563 = vmatprep.subr.mxu0 0.0
  %564 = vmatpush1.msra.mxu0 0.0
  %565 = vmatprep.mubr.f32.mxu0 0.0
  %566 = vmatmul.mubr.f32.gmra.mrb[0].mxu0 %v499
  %v567 = vpop.f32.mrb[0].mxu0
  %v568 = vadd.f32 0.0, %v567
  %v569 = vpop.f32.mrb[0].mxu0
  %v570 = vadd.f32 0.0, %v569
  %571 = vdwg.mxu0
  %v572 = vmul.f32 %v568, %v417
  %v573 = vmul.f32 %v568, %v418
  %v574 = vmul.f32 %v570, %v418
  %577 = vrot.lane.b32.xlu0 %v573, 32
  %v578 = vpop.permute.xlu0 %577
  %579 = vrot.lane.b32.xlu0 %v574, 32
  %v580 = vpop.permute.xlu0 %579
  %v581 = vsel %vm464, %v578, %v580
  %v583 = vadd.f32 %v572, %v581
  %v584 = vadd.f32 %v583, %v489
  %v585 = vadd.f32 %v473, %v584
  %v586 = vxor.u32 %v585, 2147483648
  %v587 = vmul.f32 %v586, 1.442695
  %v588 = vpow.pop %v587
  %v589 = vadd.f32 %v588, 1.0
  %v590 = vrcp.pop %v589
  %v591 = vmul.f32 1.0, %v590
  %593 = vrot.lane.b32.xlu0 %v584, 64
  %v594 = vpop.permute.xlu0 %593
  %v596 = vmul.f32 %v591, %v594
  %598 = vrot.lane.b32.xlu0 %v596, 64
  %v599 = vpop.permute.xlu0 %598
  %v601 = vadd.f32 %v473, %v599
  %v602 = vtanh.pop %v601
  %v603 = vsub.f32 1.0, %v591
  %605 = vrot.lane.b32.xlu0 %v602, 96
  %v606 = vpop.permute.xlu0 %605
  %v608 = vmul.f32 %v603, %v606
  %v609 = vmul.f32 %v591, 0.0
  %v610 = vadd.f32 %v608, %v609
  %612 = vrot.lane.b32.xlu0 %v610, 96
  %v613 = vpop.permute.xlu0 %612
  %v614 = vsel %vm464, %v613, 0
  %616 = vmatprep.subr.mxu0 %v491
  %617 = vmatpush1.msra.mxu0 %v490
  %618 = vmatprep.subr.mxu0 %v493
  %619 = vmatpush1.msra.mxu0 %v492
  %620 = vmatprep.subr.mxu0 %v495
  %621 = vmatpush1.msra.mxu0 %v494
  %622 = vmatprep.subr.mxu0 %v497
  %623 = vmatpush1.msra.mxu0 %v496
  %624 = vmatprep.subr.mxu0 0.0
  %625 = vmatpush1.msra.mxu0 0.0
  %626 = vmatprep.subr.mxu0 0.0
  %627 = vmatpush1.msra.mxu0 0.0
  %628 = vmatprep.subr.mxu0 0.0
  %629 = vmatpush1.msra.mxu0 0.0
  %630 = vmatprep.subr.mxu0 0.0
  %631 = vmatpush1.msra.mxu0 0.0
  %632 = vmatprep.subr.mxu0 0.0
  %633 = vmatpush1.msra.mxu0 0.0
  %634 = vmatprep.subr.mxu0 0.0
  %635 = vmatpush1.msra.mxu0 0.0
  %636 = vmatprep.subr.mxu0 0.0
  %637 = vmatpush1.msra.mxu0 0.0
  %638 = vmatprep.subr.mxu0 0.0
  %639 = vmatpush1.msra.mxu0 0.0
  %640 = vmatprep.subr.mxu0 0.0
  %641 = vmatpush1.msra.mxu0 0.0
  %642 = vmatprep.subr.mxu0 0.0
  %643 = vmatpush1.msra.mxu0 0.0
  %644 = vmatprep.subr.mxu0 0.0
  %645 = vmatpush1.msra.mxu0 0.0
  %646 = vmatprep.subr.mxu0 0.0
  %647 = vmatpush1.msra.mxu0 0.0
  %648 = vmatprep.subr.mxu0 0.0
  %649 = vmatpush1.msra.mxu0 0.0
  %650 = vmatprep.subr.mxu0 0.0
  %651 = vmatpush1.msra.mxu0 0.0
  %652 = vmatprep.subr.mxu0 0.0
  %653 = vmatpush1.msra.mxu0 0.0
  %654 = vmatprep.subr.mxu0 0.0
  %655 = vmatpush1.msra.mxu0 0.0
  %656 = vmatprep.subr.mxu0 0.0
  %657 = vmatpush1.msra.mxu0 0.0
  %658 = vmatprep.subr.mxu0 0.0
  %659 = vmatpush1.msra.mxu0 0.0
  %660 = vmatprep.subr.mxu0 0.0
  %661 = vmatpush1.msra.mxu0 0.0
  %662 = vmatprep.subr.mxu0 0.0
  %663 = vmatpush1.msra.mxu0 0.0
  %664 = vmatprep.subr.mxu0 0.0
  %665 = vmatpush1.msra.mxu0 0.0
  %666 = vmatprep.subr.mxu0 0.0
  %667 = vmatpush1.msra.mxu0 0.0
  %668 = vmatprep.subr.mxu0 0.0
  %669 = vmatpush1.msra.mxu0 0.0
  %670 = vmatprep.subr.mxu0 0.0
  %671 = vmatpush1.msra.mxu0 0.0
  %672 = vmatprep.subr.mxu0 0.0
  %673 = vmatpush1.msra.mxu0 0.0
  %674 = vmatprep.subr.mxu0 0.0
  %675 = vmatpush1.msra.mxu0 0.0
  %676 = vmatprep.subr.mxu0 0.0
  %677 = vmatpush1.msra.mxu0 0.0
  %678 = vmatprep.subr.mxu0 0.0
  %679 = vmatpush1.msra.mxu0 0.0
  %680 = vmatprep.mubr.f32.mxu0 0.0
  %681 = vmatmul.mubr.f32.gmra.mrb[0].mxu0 %v614
  %v682 = vpop.f32.mrb[0].mxu0
  %v683 = vadd.f32 0.0, %v682
  %v684 = vpop.f32.mrb[0].mxu0
  %v685 = vadd.f32 0.0, %v684
  %686 = vdwg.mxu0
  %v687 = vmul.f32 %v683, %v417
  %v688 = vmul.f32 %v683, %v418
  %v689 = vmul.f32 %v685, %v418
  %692 = vrot.lane.b32.xlu0 %v688, 32
  %v693 = vpop.permute.xlu0 %692
  %694 = vrot.lane.b32.xlu0 %v689, 32
  %v695 = vpop.permute.xlu0 %694
  %v696 = vsel %vm464, %v693, %v695
  %v698 = vadd.f32 %v687, %v696
  %v699 = vadd.f32 %v698, %v489
  %v701 = vrot.slane %v699, 4
  %v703 = vadd.f32 %v473, %v701
  %v704 = vxor.u32 %v703, 2147483648
  %v705 = vmul.f32 %v704, 1.442695
  %v706 = vpow.pop %v705
  %v707 = vadd.f32 %v706, 1.0
  %v708 = vrcp.pop %v707
  %v709 = vmul.f32 1.0, %v708
  %710 = vrot.lane.b32.xlu0 %v701, 64
  %v711 = vpop.permute.xlu0 %710
  %v713 = vmul.f32 %v709, %v711
  %715 = vrot.lane.b32.xlu0 %v713, 64
  %v716 = vpop.permute.xlu0 %715
  %v718 = vadd.f32 %v473, %v716
  %v719 = vtanh.pop %v718
  %v720 = vsub.f32 1.0, %v709
  %722 = vrot.lane.b32.xlu0 %v719, 96
  %v723 = vpop.permute.xlu0 %722
  %v725 = vmul.f32 %v720, %v723
  %v726 = vrot.slane %v610, 4
  %v728 = vmul.f32 %v709, %v726
  %v729 = vadd.f32 %v725, %v728
  %v731 = vrot.slane %v729, 4
  %732 = vrot.lane.b32.xlu0 %v731, 96
  %v733 = vpop.permute.xlu0 %732
  %v734 = vsel %vm464, %v733, 0
  %736 = vmatprep.subr.mxu0 %v491
  %737 = vmatpush1.msra.mxu0 %v490
  %738 = vmatprep.subr.mxu0 %v493
  %739 = vmatpush1.msra.mxu0 %v492
  %740 = vmatprep.subr.mxu0 %v495
  %741 = vmatpush1.msra.mxu0 %v494
  %742 = vmatprep.subr.mxu0 %v497
  %743 = vmatpush1.msra.mxu0 %v496
  %744 = vmatprep.subr.mxu0 0.0
  %745 = vmatpush1.msra.mxu0 0.0
  %746 = vmatprep.subr.mxu0 0.0
  %747 = vmatpush1.msra.mxu0 0.0
  %748 = vmatprep.subr.mxu0 0.0
  %749 = vmatpush1.msra.mxu0 0.0
  %750 = vmatprep.subr.mxu0 0.0
  %751 = vmatpush1.msra.mxu0 0.0
  %752 = vmatprep.subr.mxu0 0.0
  %753 = vmatpush1.msra.mxu0 0.0
  %754 = vmatprep.subr.mxu0 0.0
  %755 = vmatpush1.msra.mxu0 0.0
  %756 = vmatprep.subr.mxu0 0.0
  %757 = vmatpush1.msra.mxu0 0.0
  %758 = vmatprep.subr.mxu0 0.0
  %759 = vmatpush1.msra.mxu0 0.0
  %760 = vmatprep.subr.mxu0 0.0
  %761 = vmatpush1.msra.mxu0 0.0
  %762 = vmatprep.subr.mxu0 0.0
  %763 = vmatpush1.msra.mxu0 0.0
  %764 = vmatprep.subr.mxu0 0.0
  %765 = vmatpush1.msra.mxu0 0.0
  %766 = vmatprep.subr.mxu0 0.0
  %767 = vmatpush1.msra.mxu0 0.0
  %768 = vmatprep.subr.mxu0 0.0
  %769 = vmatpush1.msra.mxu0 0.0
  %770 = vmatprep.subr.mxu0 0.0
  %771 = vmatpush1.msra.mxu0 0.0
  %772 = vmatprep.subr.mxu0 0.0
  %773 = vmatpush1.msra.mxu0 0.0
  %774 = vmatprep.subr.mxu0 0.0
  %775 = vmatpush1.msra.mxu0 0.0
  %776 = vmatprep.subr.mxu0 0.0
  %777 = vmatpush1.msra.mxu0 0.0
  %778 = vmatprep.subr.mxu0 0.0
  %779 = vmatpush1.msra.mxu0 0.0
  %780 = vmatprep.subr.mxu0 0.0
  %781 = vmatpush1.msra.mxu0 0.0
  %782 = vmatprep.subr.mxu0 0.0
  %783 = vmatpush1.msra.mxu0 0.0
  %784 = vmatprep.subr.mxu0 0.0
  %785 = vmatpush1.msra.mxu0 0.0
  %786 = vmatprep.subr.mxu0 0.0
  %787 = vmatpush1.msra.mxu0 0.0
  %788 = vmatprep.subr.mxu0 0.0
  %789 = vmatpush1.msra.mxu0 0.0
  %790 = vmatprep.subr.mxu0 0.0
  %791 = vmatpush1.msra.mxu0 0.0
  %792 = vmatprep.subr.mxu0 0.0
  %793 = vmatpush1.msra.mxu0 0.0
  %794 = vmatprep.subr.mxu0 0.0
  %795 = vmatpush1.msra.mxu0 0.0
  %796 = vmatprep.subr.mxu0 0.0
  %797 = vmatpush1.msra.mxu0 0.0
  %798 = vmatprep.subr.mxu0 0.0
  %799 = vmatpush1.msra.mxu0 0.0
  %800 = vmatprep.mubr.f32.mxu0 0.0
  %801 = vmatmul.mubr.f32.gmra.mrb[0].mxu0 %v734
  %v802 = vpop.f32.mrb[0].mxu0
  %v803 = vadd.f32 0.0, %v802
  %v804 = vpop.f32.mrb[0].mxu0
  %v805 = vadd.f32 0.0, %v804
  %806 = vdwg.mxu0
  %v807 = vmul.f32 %v803, %v417
  %v808 = vmul.f32 %v803, %v418
  %v809 = vmul.f32 %v805, %v418
  %812 = vrot.lane.b32.xlu0 %v808, 32
  %v813 = vpop.permute.xlu0 %812
  %814 = vrot.lane.b32.xlu0 %v809, 32
  %v815 = vpop.permute.xlu0 %814
  %v816 = vsel %vm464, %v813, %v815
  %v818 = vadd.f32 %v807, %v816
  %v819 = vadd.f32 %v818, %v489
  %v820 = vadd.f32 %v474, %v819
  %v821 = vxor.u32 %v820, 2147483648
  %v822 = vmul.f32 %v821, 1.442695
  %v823 = vpow.pop %v822
  %v824 = vadd.f32 %v823, 1.0
  %v825 = vrcp.pop %v824
  %v826 = vmul.f32 1.0, %v825
  %828 = vrot.lane.b32.xlu0 %v819, 64
  %v829 = vpop.permute.xlu0 %828
  %v831 = vmul.f32 %v826, %v829
  %833 = vrot.lane.b32.xlu0 %v831, 64
  %v834 = vpop.permute.xlu0 %833
  %v836 = vadd.f32 %v474, %v834
  %v837 = vtanh.pop %v836
  %v838 = vsub.f32 1.0, %v826
  %840 = vrot.lane.b32.xlu0 %v837, 96
  %v841 = vpop.permute.xlu0 %840
  %v843 = vmul.f32 %v838, %v841
  %v845 = vmul.f32 %v826, %v731
  %v846 = vadd.f32 %v843, %v845
  %848 = vrot.lane.b32.xlu0 %v846, 96
  %v849 = vpop.permute.xlu0 %848
  %v850 = vsel %vm464, %v849, 0
  %852 = vmatprep.subr.mxu0 %v491
  %853 = vmatpush1.msra.mxu0 %v490
  %854 = vmatprep.subr.mxu0 %v493
  %855 = vmatpush1.msra.mxu0 %v492
  %856 = vmatprep.subr.mxu0 %v495
  %857 = vmatpush1.msra.mxu0 %v494
  %858 = vmatprep.subr.mxu0 %v497
  %859 = vmatpush1.msra.mxu0 %v496
  %860 = vmatprep.subr.mxu0 0.0
  %861 = vmatpush1.msra.mxu0 0.0
  %862 = vmatprep.subr.mxu0 0.0
  %863 = vmatpush1.msra.mxu0 0.0
  %864 = vmatprep.subr.mxu0 0.0
  %865 = vmatpush1.msra.mxu0 0.0
  %866 = vmatprep.subr.mxu0 0.0
  %867 = vmatpush1.msra.mxu0 0.0
  %868 = vmatprep.subr.mxu0 0.0
  %869 = vmatpush1.msra.mxu0 0.0
  %870 = vmatprep.subr.mxu0 0.0
  %871 = vmatpush1.msra.mxu0 0.0
  %872 = vmatprep.subr.mxu0 0.0
  %873 = vmatpush1.msra.mxu0 0.0
  %874 = vmatprep.subr.mxu0 0.0
  %875 = vmatpush1.msra.mxu0 0.0
  %876 = vmatprep.subr.mxu0 0.0
  %877 = vmatpush1.msra.mxu0 0.0
  %878 = vmatprep.subr.mxu0 0.0
  %879 = vmatpush1.msra.mxu0 0.0
  %880 = vmatprep.subr.mxu0 0.0
  %881 = vmatpush1.msra.mxu0 0.0
  %882 = vmatprep.subr.mxu0 0.0
  %883 = vmatpush1.msra.mxu0 0.0
  %884 = vmatprep.subr.mxu0 0.0
  %885 = vmatpush1.msra.mxu0 0.0
  %886 = vmatprep.subr.mxu0 0.0
  %887 = vmatpush1.msra.mxu0 0.0
  %888 = vmatprep.subr.mxu0 0.0
  %889 = vmatpush1.msra.mxu0 0.0
  %890 = vmatprep.subr.mxu0 0.0
  %891 = vmatpush1.msra.mxu0 0.0
  %892 = vmatprep.subr.mxu0 0.0
  %893 = vmatpush1.msra.mxu0 0.0
  %894 = vmatprep.subr.mxu0 0.0
  %895 = vmatpush1.msra.mxu0 0.0
  %896 = vmatprep.subr.mxu0 0.0
  %897 = vmatpush1.msra.mxu0 0.0
  %898 = vmatprep.subr.mxu0 0.0
  %899 = vmatpush1.msra.mxu0 0.0
  %900 = vmatprep.subr.mxu0 0.0
  %901 = vmatpush1.msra.mxu0 0.0
  %902 = vmatprep.subr.mxu0 0.0
  %903 = vmatpush1.msra.mxu0 0.0
  %904 = vmatprep.subr.mxu0 0.0
  %905 = vmatpush1.msra.mxu0 0.0
  %906 = vmatprep.subr.mxu0 0.0
  %907 = vmatpush1.msra.mxu0 0.0
  %908 = vmatprep.subr.mxu0 0.0
  %909 = vmatpush1.msra.mxu0 0.0
  %910 = vmatprep.subr.mxu0 0.0
  %911 = vmatpush1.msra.mxu0 0.0
  %912 = vmatprep.subr.mxu0 0.0
  %913 = vmatpush1.msra.mxu0 0.0
  %914 = vmatprep.subr.mxu0 0.0
  %915 = vmatpush1.msra.mxu0 0.0
  %916 = vmatprep.mubr.f32.mxu0 0.0
  %917 = vmatmul.mubr.f32.gmra.mrb[0].mxu0 %v850
  %v918 = vpop.f32.mrb[0].mxu0
  %v919 = vadd.f32 0.0, %v918
  %v920 = vpop.f32.mrb[0].mxu0
  %v921 = vadd.f32 0.0, %v920
  %922 = vdwg.mxu0
  %v923 = vmul.f32 %v919, %v417
  %v924 = vmul.f32 %v919, %v418
  %v925 = vmul.f32 %v921, %v418
  %928 = vrot.lane.b32.xlu0 %v924, 32
  %v929 = vpop.permute.xlu0 %928
  %930 = vrot.lane.b32.xlu0 %v925, 32
  %v931 = vpop.permute.xlu0 %930
  %v932 = vsel %vm464, %v929, %v931
  %v934 = vadd.f32 %v923, %v932
  %v935 = vadd.f32 %v934, %v489
  %v937 = vrot.slane %v935, 4
  %v939 = vadd.f32 %v474, %v937
  %v940 = vxor.u32 %v939, 2147483648
  %v941 = vmul.f32 %v940, 1.442695
  %v942 = vpow.pop %v941
  %v943 = vadd.f32 %v942, 1.0
  %v944 = vrcp.pop %v943
  %v945 = vmul.f32 1.0, %v944
  %946 = vrot.lane.b32.xlu0 %v937, 64
  %v947 = vpop.permute.xlu0 %946
  %v949 = vmul.f32 %v945, %v947
  %951 = vrot.lane.b32.xlu0 %v949, 64
  %v952 = vpop.permute.xlu0 %951
  %v954 = vadd.f32 %v474, %v952
  %v955 = vtanh.pop %v954
  %v956 = vsub.f32 1.0, %v945
  %958 = vrot.lane.b32.xlu0 %v955, 96
  %v959 = vpop.permute.xlu0 %958
  %v961 = vmul.f32 %v956, %v959
  %v962 = vrot.slane %v846, 4
  %v964 = vmul.f32 %v945, %v962
  %v965 = vadd.f32 %v961, %v964
  %v967 = vrot.slane %v965, 4
  %968 = vrot.lane.b32.xlu0 %v967, 96
  %v969 = vpop.permute.xlu0 %968
  %v970 = vsel %vm464, %v969, 0
  %972 = vmatprep.subr.mxu0 %v491
  %973 = vmatpush1.msra.mxu0 %v490
  %974 = vmatprep.subr.mxu0 %v493
  %975 = vmatpush1.msra.mxu0 %v492
  %976 = vmatprep.subr.mxu0 %v495
  %977 = vmatpush1.msra.mxu0 %v494
  %978 = vmatprep.subr.mxu0 %v497
  %979 = vmatpush1.msra.mxu0 %v496
  %980 = vmatprep.subr.mxu0 0.0
  %981 = vmatpush1.msra.mxu0 0.0
  %982 = vmatprep.subr.mxu0 0.0
  %983 = vmatpush1.msra.mxu0 0.0
  %984 = vmatprep.subr.mxu0 0.0
  %985 = vmatpush1.msra.mxu0 0.0
  %986 = vmatprep.subr.mxu0 0.0
  %987 = vmatpush1.msra.mxu0 0.0
  %988 = vmatprep.subr.mxu0 0.0
  %989 = vmatpush1.msra.mxu0 0.0
  %990 = vmatprep.subr.mxu0 0.0
  %991 = vmatpush1.msra.mxu0 0.0
  %992 = vmatprep.subr.mxu0 0.0
  %993 = vmatpush1.msra.mxu0 0.0
  %994 = vmatprep.subr.mxu0 0.0
  %995 = vmatpush1.msra.mxu0 0.0
  %996 = vmatprep.subr.mxu0 0.0
  %997 = vmatpush1.msra.mxu0 0.0
  %998 = vmatprep.subr.mxu0 0.0
  %999 = vmatpush1.msra.mxu0 0.0
  %1000 = vmatprep.subr.mxu0 0.0
  %1001 = vmatpush1.msra.mxu0 0.0
  %1002 = vmatprep.subr.mxu0 0.0
  %1003 = vmatpush1.msra.mxu0 0.0
  %1004 = vmatprep.subr.mxu0 0.0
  %1005 = vmatpush1.msra.mxu0 0.0
  %1006 = vmatprep.subr.mxu0 0.0
  %1007 = vmatpush1.msra.mxu0 0.0
  %1008 = vmatprep.subr.mxu0 0.0
  %1009 = vmatpush1.msra.mxu0 0.0
  %1010 = vmatprep.subr.mxu0 0.0
  %1011 = vmatpush1.msra.mxu0 0.0
  %1012 = vmatprep.subr.mxu0 0.0
  %1013 = vmatpush1.msra.mxu0 0.0
  %1014 = vmatprep.subr.mxu0 0.0
  %1015 = vmatpush1.msra.mxu0 0.0
  %1016 = vmatprep.subr.mxu0 0.0
  %1017 = vmatpush1.msra.mxu0 0.0
  %1018 = vmatprep.subr.mxu0 0.0
  %1019 = vmatpush1.msra.mxu0 0.0
  %1020 = vmatprep.subr.mxu0 0.0
  %1021 = vmatpush1.msra.mxu0 0.0
  %1022 = vmatprep.subr.mxu0 0.0
  %1023 = vmatpush1.msra.mxu0 0.0
  %1024 = vmatprep.subr.mxu0 0.0
  %1025 = vmatpush1.msra.mxu0 0.0
  %1026 = vmatprep.subr.mxu0 0.0
  %1027 = vmatpush1.msra.mxu0 0.0
  %1028 = vmatprep.subr.mxu0 0.0
  %1029 = vmatpush1.msra.mxu0 0.0
  %1030 = vmatprep.subr.mxu0 0.0
  %1031 = vmatpush1.msra.mxu0 0.0
  %1032 = vmatprep.subr.mxu0 0.0
  %1033 = vmatpush1.msra.mxu0 0.0
  %1034 = vmatprep.subr.mxu0 0.0
  %1035 = vmatpush1.msra.mxu0 0.0
  %1036 = vmatprep.mubr.f32.mxu0 0.0
  %1037 = vmatmul.mubr.f32.gmra.mrb[0].mxu0 %v970
  %v1038 = vpop.f32.mrb[0].mxu0
  %v1039 = vadd.f32 0.0, %v1038
  %v1040 = vpop.f32.mrb[0].mxu0
  %v1041 = vadd.f32 0.0, %v1040
  %1042 = vdwg.mxu0
  %v1043 = vmul.f32 %v1039, %v417
  %v1044 = vmul.f32 %v1039, %v418
  %v1045 = vmul.f32 %v1041, %v418
  %1048 = vrot.lane.b32.xlu0 %v1044, 32
  %v1049 = vpop.permute.xlu0 %1048
  %1050 = vrot.lane.b32.xlu0 %v1045, 32
  %v1051 = vpop.permute.xlu0 %1050
  %v1052 = vsel %vm464, %v1049, %v1051
  %v1054 = vadd.f32 %v1043, %v1052
  %v1055 = vadd.f32 %v1054, %v489
  %v1056 = vadd.f32 %v475, %v1055
  %v1057 = vxor.u32 %v1056, 2147483648
  %v1058 = vmul.f32 %v1057, 1.442695
  %v1059 = vpow.pop %v1058
  %v1060 = vadd.f32 %v1059, 1.0
  %v1061 = vrcp.pop %v1060
  %v1062 = vmul.f32 1.0, %v1061
  %1064 = vrot.lane.b32.xlu0 %v1055, 64
  %v1065 = vpop.permute.xlu0 %1064
  %v1067 = vmul.f32 %v1062, %v1065
  %1069 = vrot.lane.b32.xlu0 %v1067, 64
  %v1070 = vpop.permute.xlu0 %1069
  %v1072 = vadd.f32 %v475, %v1070
  %v1073 = vtanh.pop %v1072
  %v1074 = vsub.f32 1.0, %v1062
  %1076 = vrot.lane.b32.xlu0 %v1073, 96
  %v1077 = vpop.permute.xlu0 %1076
  %v1079 = vmul.f32 %v1074, %v1077
  %v1081 = vmul.f32 %v1062, %v967
  %v1082 = vadd.f32 %v1079, %v1081
  %1084 = vrot.lane.b32.xlu0 %v1082, 96
  %v1085 = vpop.permute.xlu0 %1084
  %v1086 = vsel %vm464, %v1085, 0
  %1088 = vmatprep.subr.mxu0 %v491
  %1089 = vmatpush1.msra.mxu0 %v490
  %1090 = vmatprep.subr.mxu0 %v493
  %1091 = vmatpush1.msra.mxu0 %v492
  %1092 = vmatprep.subr.mxu0 %v495
  %1093 = vmatpush1.msra.mxu0 %v494
  %1094 = vmatprep.subr.mxu0 %v497
  %1095 = vmatpush1.msra.mxu0 %v496
  %1096 = vmatprep.subr.mxu0 0.0
  %1097 = vmatpush1.msra.mxu0 0.0
  %1098 = vmatprep.subr.mxu0 0.0
  %1099 = vmatpush1.msra.mxu0 0.0
  %1100 = vmatprep.subr.mxu0 0.0
  %1101 = vmatpush1.msra.mxu0 0.0
  %1102 = vmatprep.subr.mxu0 0.0
  %1103 = vmatpush1.msra.mxu0 0.0
  %1104 = vmatprep.subr.mxu0 0.0
  %1105 = vmatpush1.msra.mxu0 0.0
  %1106 = vmatprep.subr.mxu0 0.0
  %1107 = vmatpush1.msra.mxu0 0.0
  %1108 = vmatprep.subr.mxu0 0.0
  %1109 = vmatpush1.msra.mxu0 0.0
  %1110 = vmatprep.subr.mxu0 0.0
  %1111 = vmatpush1.msra.mxu0 0.0
  %1112 = vmatprep.subr.mxu0 0.0
  %1113 = vmatpush1.msra.mxu0 0.0
  %1114 = vmatprep.subr.mxu0 0.0
  %1115 = vmatpush1.msra.mxu0 0.0
  %1116 = vmatprep.subr.mxu0 0.0
  %1117 = vmatpush1.msra.mxu0 0.0
  %1118 = vmatprep.subr.mxu0 0.0
  %1119 = vmatpush1.msra.mxu0 0.0
  %1120 = vmatprep.subr.mxu0 0.0
  %1121 = vmatpush1.msra.mxu0 0.0
  %1122 = vmatprep.subr.mxu0 0.0
  %1123 = vmatpush1.msra.mxu0 0.0
  %1124 = vmatprep.subr.mxu0 0.0
  %1125 = vmatpush1.msra.mxu0 0.0
  %1126 = vmatprep.subr.mxu0 0.0
  %1127 = vmatpush1.msra.mxu0 0.0
  %1128 = vmatprep.subr.mxu0 0.0
  %1129 = vmatpush1.msra.mxu0 0.0
  %1130 = vmatprep.subr.mxu0 0.0
  %1131 = vmatpush1.msra.mxu0 0.0
  %1132 = vmatprep.subr.mxu0 0.0
  %1133 = vmatpush1.msra.mxu0 0.0
  %1134 = vmatprep.subr.mxu0 0.0
  %1135 = vmatpush1.msra.mxu0 0.0
  %1136 = vmatprep.subr.mxu0 0.0
  %1137 = vmatpush1.msra.mxu0 0.0
  %1138 = vmatprep.subr.mxu0 0.0
  %1139 = vmatpush1.msra.mxu0 0.0
  %1140 = vmatprep.subr.mxu0 0.0
  %1141 = vmatpush1.msra.mxu0 0.0
  %1142 = vmatprep.subr.mxu0 0.0
  %1143 = vmatpush1.msra.mxu0 0.0
  %1144 = vmatprep.subr.mxu0 0.0
  %1145 = vmatpush1.msra.mxu0 0.0
  %1146 = vmatprep.subr.mxu0 0.0
  %1147 = vmatpush1.msra.mxu0 0.0
  %1148 = vmatprep.subr.mxu0 0.0
  %1149 = vmatpush1.msra.mxu0 0.0
  %1150 = vmatprep.subr.mxu0 0.0
  %1151 = vmatpush1.msra.mxu0 0.0
  %1152 = vmatprep.mubr.f32.mxu0 0.0
  %1153 = vmatmul.mubr.f32.gmra.mrb[0].mxu0 %v1086
  %v1154 = vpop.f32.mrb[0].mxu0
  %v1155 = vadd.f32 0.0, %v1154
  %v1156 = vpop.f32.mrb[0].mxu0
  %v1157 = vadd.f32 0.0, %v1156
  %1158 = vdwg.mxu0
  %v1159 = vmul.f32 %v1155, %v417
  %v1160 = vmul.f32 %v1155, %v418
  %v1161 = vmul.f32 %v1157, %v418
  %1164 = vrot.lane.b32.xlu0 %v1160, 32
  %v1165 = vpop.permute.xlu0 %1164
  %1166 = vrot.lane.b32.xlu0 %v1161, 32
  %v1167 = vpop.permute.xlu0 %1166
  %v1168 = vsel %vm464, %v1165, %v1167
  %v1170 = vadd.f32 %v1159, %v1168
  %v1171 = vadd.f32 %v1170, %v489
  %v1173 = vrot.slane %v1171, 4
  %v1175 = vadd.f32 %v475, %v1173
  %v1176 = vxor.u32 %v1175, 2147483648
  %v1177 = vmul.f32 %v1176, 1.442695
  %v1178 = vpow.pop %v1177
  %v1179 = vadd.f32 %v1178, 1.0
  %v1180 = vrcp.pop %v1179
  %v1181 = vmul.f32 1.0, %v1180
  %1182 = vrot.lane.b32.xlu0 %v1173, 64
  %v1183 = vpop.permute.xlu0 %1182
  %v1185 = vmul.f32 %v1181, %v1183
  %1187 = vrot.lane.b32.xlu0 %v1185, 64
  %v1188 = vpop.permute.xlu0 %1187
  %v1190 = vadd.f32 %v475, %v1188
  %v1191 = vtanh.pop %v1190
  %v1192 = vsub.f32 1.0, %v1181
  %1194 = vrot.lane.b32.xlu0 %v1191, 96
  %v1195 = vpop.permute.xlu0 %1194
  %v1197 = vmul.f32 %v1192, %v1195
  %v1198 = vrot.slane %v1082, 4
  %v1200 = vmul.f32 %v1181, %v1198
  %v1201 = vadd.f32 %v1197, %v1200
  %v1203 = vrot.slane %v1201, 4
  %1204 = vrot.lane.b32.xlu0 %v1203, 96
  %v1205 = vpop.permute.xlu0 %1204
  %v1206 = vsel %vm464, %v1205, 0
  %1208 = vmatprep.subr.mxu0 %v491
  %1209 = vmatpush1.msra.mxu0 %v490
  %1210 = vmatprep.subr.mxu0 %v493
  %1211 = vmatpush1.msra.mxu0 %v492
  %1212 = vmatprep.subr.mxu0 %v495
  %1213 = vmatpush1.msra.mxu0 %v494
  %1214 = vmatprep.subr.mxu0 %v497
  %1215 = vmatpush1.msra.mxu0 %v496
  %1216 = vmatprep.subr.mxu0 0.0
  %1217 = vmatpush1.msra.mxu0 0.0
  %1218 = vmatprep.subr.mxu0 0.0
  %1219 = vmatpush1.msra.mxu0 0.0
  %1220 = vmatprep.subr.mxu0 0.0
  %1221 = vmatpush1.msra.mxu0 0.0
  %1222 = vmatprep.subr.mxu0 0.0
  %1223 = vmatpush1.msra.mxu0 0.0
  %1224 = vmatprep.subr.mxu0 0.0
  %1225 = vmatpush1.msra.mxu0 0.0
  %1226 = vmatprep.subr.mxu0 0.0
  %1227 = vmatpush1.msra.mxu0 0.0
  %1228 = vmatprep.subr.mxu0 0.0
  %1229 = vmatpush1.msra.mxu0 0.0
  %1230 = vmatprep.subr.mxu0 0.0
  %1231 = vmatpush1.msra.mxu0 0.0
  %1232 = vmatprep.subr.mxu0 0.0
  %1233 = vmatpush1.msra.mxu0 0.0
  %1234 = vmatprep.subr.mxu0 0.0
  %1235 = vmatpush1.msra.mxu0 0.0
  %1236 = vmatprep.subr.mxu0 0.0
  %1237 = vmatpush1.msra.mxu0 0.0
  %1238 = vmatprep.subr.mxu0 0.0
  %1239 = vmatpush1.msra.mxu0 0.0
  %1240 = vmatprep.subr.mxu0 0.0
  %1241 = vmatpush1.msra.mxu0 0.0
  %1242 = vmatprep.subr.mxu0 0.0
  %1243 = vmatpush1.msra.mxu0 0.0
  %1244 = vmatprep.subr.mxu0 0.0
  %1245 = vmatpush1.msra.mxu0 0.0
  %1246 = vmatprep.subr.mxu0 0.0
  %1247 = vmatpush1.msra.mxu0 0.0
  %1248 = vmatprep.subr.mxu0 0.0
  %1249 = vmatpush1.msra.mxu0 0.0
  %1250 = vmatprep.subr.mxu0 0.0
  %1251 = vmatpush1.msra.mxu0 0.0
  %1252 = vmatprep.subr.mxu0 0.0
  %1253 = vmatpush1.msra.mxu0 0.0
  %1254 = vmatprep.subr.mxu0 0.0
  %1255 = vmatpush1.msra.mxu0 0.0
  %1256 = vmatprep.subr.mxu0 0.0
  %1257 = vmatpush1.msra.mxu0 0.0
  %1258 = vmatprep.subr.mxu0 0.0
  %1259 = vmatpush1.msra.mxu0 0.0
  %1260 = vmatprep.subr.mxu0 0.0
  %1261 = vmatpush1.msra.mxu0 0.0
  %1262 = vmatprep.subr.mxu0 0.0
  %1263 = vmatpush1.msra.mxu0 0.0
  %1264 = vmatprep.subr.mxu0 0.0
  %1265 = vmatpush1.msra.mxu0 0.0
  %1266 = vmatprep.subr.mxu0 0.0
  %1267 = vmatpush1.msra.mxu0 0.0
  %1268 = vmatprep.subr.mxu0 0.0
  %1269 = vmatpush1.msra.mxu0 0.0
  %1270 = vmatprep.subr.mxu0 0.0
  %1271 = vmatpush1.msra.mxu0 0.0
  %1272 = vmatprep.mubr.f32.mxu0 0.0
  %1273 = vmatmul.mubr.f32.gmra.mrb[0].mxu0 %v1206
  %v1274 = vpop.f32.mrb[0].mxu0
  %v1275 = vadd.f32 0.0, %v1274
  %v1276 = vpop.f32.mrb[0].mxu0
  %v1277 = vadd.f32 0.0, %v1276
  %1278 = vdwg.mxu0
  %v1279 = vmul.f32 %v1275, %v417
  %v1280 = vmul.f32 %v1275, %v418
  %v1281 = vmul.f32 %v1277, %v418
  %1284 = vrot.lane.b32.xlu0 %v1280, 32
  %v1285 = vpop.permute.xlu0 %1284
  %1286 = vrot.lane.b32.xlu0 %v1281, 32
  %v1287 = vpop.permute.xlu0 %1286
  %v1288 = vsel %vm464, %v1285, %v1287
  %v1290 = vadd.f32 %v1279, %v1288
  %v1291 = vadd.f32 %v1290, %v489
  %v1292 = vadd.f32 %v476, %v1291
  %v1293 = vxor.u32 %v1292, 2147483648
  %v1294 = vmul.f32 %v1293, 1.442695
  %v1295 = vpow.pop %v1294
  %v1296 = vadd.f32 %v1295, 1.0
  %v1297 = vrcp.pop %v1296
  %v1298 = vmul.f32 1.0, %v1297
  %1300 = vrot.lane.b32.xlu0 %v1291, 64
  %v1301 = vpop.permute.xlu0 %1300
  %v1303 = vmul.f32 %v1298, %v1301
  %1305 = vrot.lane.b32.xlu0 %v1303, 64
  %v1306 = vpop.permute.xlu0 %1305
  %v1308 = vadd.f32 %v476, %v1306
  %v1309 = vtanh.pop %v1308
  %v1310 = vsub.f32 1.0, %v1298
  %1312 = vrot.lane.b32.xlu0 %v1309, 96
  %v1313 = vpop.permute.xlu0 %1312
  %v1315 = vmul.f32 %v1310, %v1313
  %v1317 = vmul.f32 %v1298, %v1203
  %v1318 = vadd.f32 %v1315, %v1317
  %1320 = vrot.lane.b32.xlu0 %v1318, 96
  %v1321 = vpop.permute.xlu0 %1320
  %v1322 = vsel %vm464, %v1321, 0
  %1324 = vmatprep.subr.mxu0 %v491
  %1325 = vmatpush1.msra.mxu0 %v490
  %1326 = vmatprep.subr.mxu0 %v493
  %1327 = vmatpush1.msra.mxu0 %v492
  %1328 = vmatprep.subr.mxu0 %v495
  %1329 = vmatpush1.msra.mxu0 %v494
  %1330 = vmatprep.subr.mxu0 %v497
  %1331 = vmatpush1.msra.mxu0 %v496
  %1332 = vmatprep.subr.mxu0 0.0
  %1333 = vmatpush1.msra.mxu0 0.0
  %1334 = vmatprep.subr.mxu0 0.0
  %1335 = vmatpush1.msra.mxu0 0.0
  %1336 = vmatprep.subr.mxu0 0.0
  %1337 = vmatpush1.msra.mxu0 0.0
  %1338 = vmatprep.subr.mxu0 0.0
  %1339 = vmatpush1.msra.mxu0 0.0
  %1340 = vmatprep.subr.mxu0 0.0
  %1341 = vmatpush1.msra.mxu0 0.0
  %1342 = vmatprep.subr.mxu0 0.0
  %1343 = vmatpush1.msra.mxu0 0.0
  %1344 = vmatprep.subr.mxu0 0.0
  %1345 = vmatpush1.msra.mxu0 0.0
  %1346 = vmatprep.subr.mxu0 0.0
  %1347 = vmatpush1.msra.mxu0 0.0
  %1348 = vmatprep.subr.mxu0 0.0
  %1349 = vmatpush1.msra.mxu0 0.0
  %1350 = vmatprep.subr.mxu0 0.0
  %1351 = vmatpush1.msra.mxu0 0.0
  %1352 = vmatprep.subr.mxu0 0.0
  %1353 = vmatpush1.msra.mxu0 0.0
  %1354 = vmatprep.subr.mxu0 0.0
  %1355 = vmatpush1.msra.mxu0 0.0
  %1356 = vmatprep.subr.mxu0 0.0
  %1357 = vmatpush1.msra.mxu0 0.0
  %1358 = vmatprep.subr.mxu0 0.0
  %1359 = vmatpush1.msra.mxu0 0.0
  %1360 = vmatprep.subr.mxu0 0.0
  %1361 = vmatpush1.msra.mxu0 0.0
  %1362 = vmatprep.subr.mxu0 0.0
  %1363 = vmatpush1.msra.mxu0 0.0
  %1364 = vmatprep.subr.mxu0 0.0
  %1365 = vmatpush1.msra.mxu0 0.0
  %1366 = vmatprep.subr.mxu0 0.0
  %1367 = vmatpush1.msra.mxu0 0.0
  %1368 = vmatprep.subr.mxu0 0.0
  %1369 = vmatpush1.msra.mxu0 0.0
  %1370 = vmatprep.subr.mxu0 0.0
  %1371 = vmatpush1.msra.mxu0 0.0
  %1372 = vmatprep.subr.mxu0 0.0
  %1373 = vmatpush1.msra.mxu0 0.0
  %1374 = vmatprep.subr.mxu0 0.0
  %1375 = vmatpush1.msra.mxu0 0.0
  %1376 = vmatprep.subr.mxu0 0.0
  %1377 = vmatpush1.msra.mxu0 0.0
  %1378 = vmatprep.subr.mxu0 0.0
  %1379 = vmatpush1.msra.mxu0 0.0
  %1380 = vmatprep.subr.mxu0 0.0
  %1381 = vmatpush1.msra.mxu0 0.0
  %1382 = vmatprep.subr.mxu0 0.0
  %1383 = vmatpush1.msra.mxu0 0.0
  %1384 = vmatprep.subr.mxu0 0.0
  %1385 = vmatpush1.msra.mxu0 0.0
  %1386 = vmatprep.subr.mxu0 0.0
  %1387 = vmatpush1.msra.mxu0 0.0
  %1388 = vmatprep.mubr.f32.mxu0 0.0
  %1389 = vmatmul.mubr.f32.gmra.mrb[0].mxu0 %v1322
  %v1390 = vpop.f32.mrb[0].mxu0
  %v1391 = vadd.f32 0.0, %v1390
  %v1392 = vpop.f32.mrb[0].mxu0
  %v1393 = vadd.f32 0.0, %v1392
  %1394 = vdwg.mxu0
  %v1395 = vmul.f32 %v1391, %v417
  %v1396 = vmul.f32 %v1391, %v418
  %v1397 = vmul.f32 %v1393, %v418
  %1400 = vrot.lane.b32.xlu0 %v1396, 32
  %v1401 = vpop.permute.xlu0 %1400
  %1402 = vrot.lane.b32.xlu0 %v1397, 32
  %v1403 = vpop.permute.xlu0 %1402
  %v1404 = vsel %vm464, %v1401, %v1403
  %v1406 = vadd.f32 %v1395, %v1404
  %v1407 = vadd.f32 %v1406, %v489
  %v1409 = vrot.slane %v1407, 4
  %v1411 = vadd.f32 %v476, %v1409
  %v1412 = vxor.u32 %v1411, 2147483648
  %v1413 = vmul.f32 %v1412, 1.442695
  %v1414 = vpow.pop %v1413
  %v1415 = vadd.f32 %v1414, 1.0
  %v1416 = vrcp.pop %v1415
  %v1417 = vmul.f32 1.0, %v1416
  %1418 = vrot.lane.b32.xlu0 %v1409, 64
  %v1419 = vpop.permute.xlu0 %1418
  %v1421 = vmul.f32 %v1417, %v1419
  %1423 = vrot.lane.b32.xlu0 %v1421, 64
  %v1424 = vpop.permute.xlu0 %1423
  %v1426 = vadd.f32 %v476, %v1424
  %v1427 = vtanh.pop %v1426
  %v1428 = vsub.f32 1.0, %v1417
  %1430 = vrot.lane.b32.xlu0 %v1427, 96
  %v1431 = vpop.permute.xlu0 %1430
  %v1433 = vmul.f32 %v1428, %v1431
  %v1434 = vrot.slane %v1318, 4
  %v1436 = vmul.f32 %v1417, %v1434
  %v1437 = vadd.f32 %v1433, %v1436
  %v1440 = vrot.slane %v1437, 6
  %v1442 = vrot.slane %v610, 1
  %1443 = vrot.lane.b32.xlu0 %v1442, 32
  %v1444 = vpop.permute.xlu0 %1443
  %v1446 = vrot.slane %v1437, 7
  %1447 = vrot.lane.b32.xlu0 %v1446, 64
  %v1448 = vpop.permute.xlu0 %1447
  %v1450 = vsel %vm464, %v613, %v1440
  %vm1451 = vcmask 523264
  %v1452 = vsel %vm1451, %v1450, %v1444
  %vm1453 = vcmask 785408
  %v1454 = vsel %vm1453, %v1452, %v1448
  %1455 = vrot.lane.b32.xlu0 %v729, 96
  %v1456 = vpop.permute.xlu0 %1455
  %v1458 = vrot.slane %v1318, 6
  %v1460 = vrot.slane %v729, 1
  %1461 = vrot.lane.b32.xlu0 %v1460, 32
  %v1462 = vpop.permute.xlu0 %1461
  %v1464 = vrot.slane %v1318, 7
  %1465 = vrot.lane.b32.xlu0 %v1464, 64
  %v1466 = vpop.permute.xlu0 %1465
  %v1468 = vsel %vm464, %v1456, %v1458
  %v1469 = vsel %vm1451, %v1468, %v1462
  %v1470 = vsel %vm1453, %v1469, %v1466
  %v1472 = vrot.slane %v1201, 6
  %v1474 = vrot.slane %v846, 1
  %1475 = vrot.lane.b32.xlu0 %v1474, 32
  %v1476 = vpop.permute.xlu0 %1475
  %v1478 = vrot.slane %v1201, 7
  %1479 = vrot.lane.b32.xlu0 %v1478, 64
  %v1480 = vpop.permute.xlu0 %1479
  %v1482 = vsel %vm464, %v849, %v1472
  %v1483 = vsel %vm1451, %v1482, %v1476
  %v1484 = vsel %vm1453, %v1483, %v1480
  %1485 = vrot.lane.b32.xlu0 %v965, 96
  %v1486 = vpop.permute.xlu0 %1485
  %v1488 = vrot.slane %v1082, 6
  %v1490 = vrot.slane %v965, 1
  %1491 = vrot.lane.b32.xlu0 %v1490, 32
  %v1492 = vpop.permute.xlu0 %1491
  %v1494 = vrot.slane %v1082, 7
  %1495 = vrot.lane.b32.xlu0 %v1494, 64
  %v1496 = vpop.permute.xlu0 %1495
  %v1498 = vsel %vm464, %v1486, %v1488
  %v1499 = vsel %vm1451, %v1498, %v1492
  %v1500 = vsel %vm1453, %v1499, %v1496
  %v1502 = vrot.slane %v965, 6
  %v1504 = vrot.slane %v1082, 1
  %1505 = vrot.lane.b32.xlu0 %v1504, 32
  %v1506 = vpop.permute.xlu0 %1505
  %v1508 = vrot.slane %v965, 7
  %1509 = vrot.lane.b32.xlu0 %v1508, 64
  %v1510 = vpop.permute.xlu0 %1509
  %v1512 = vsel %vm464, %v1085, %v1502
  %v1513 = vsel %vm1451, %v1512, %v1506
  %v1514 = vsel %vm1453, %v1513, %v1510
  %1515 = vrot.lane.b32.xlu0 %v1201, 96
  %v1516 = vpop.permute.xlu0 %1515
  %v1518 = vrot.slane %v846, 6
  %v1520 = vrot.slane %v1201, 1
  %1521 = vrot.lane.b32.xlu0 %v1520, 32
  %v1522 = vpop.permute.xlu0 %1521
  %v1524 = vrot.slane %v846, 7
  %1525 = vrot.lane.b32.xlu0 %v1524, 64
  %v1526 = vpop.permute.xlu0 %1525
  %v1528 = vsel %vm464, %v1516, %v1518
  %v1529 = vsel %vm1451, %v1528, %v1522
  %v1530 = vsel %vm1453, %v1529, %v1526
  %v1532 = vrot.slane %v729, 6
  %v1534 = vrot.slane %v1318, 1
  %1535 = vrot.lane.b32.xlu0 %v1534, 32
  %v1536 = vpop.permute.xlu0 %1535
  %v1538 = vrot.slane %v729, 7
  %1539 = vrot.lane.b32.xlu0 %v1538, 64
  %v1540 = vpop.permute.xlu0 %1539
  %v1542 = vsel %vm464, %v1321, %v1532
  %v1543 = vsel %vm1451, %v1542, %v1536
  %v1544 = vsel %vm1453, %v1543, %v1540
  %1545 = vrot.lane.b32.xlu0 %v1437, 96
  %v1546 = vpop.permute.xlu0 %1545
  %v1548 = vrot.slane %v610, 6
  %v1550 = vrot.slane %v1437, 1
  %1551 = vrot.lane.b32.xlu0 %v1550, 32
  %v1552 = vpop.permute.xlu0 %1551
  %v1554 = vrot.slane %v610, 7
  %1555 = vrot.lane.b32.xlu0 %v1554, 64
  %v1556 = vpop.permute.xlu0 %1555
  %v1558 = vsel %vm464, %v1546, %v1548
  %v1559 = vsel %vm1451, %v1558, %v1552
  %v1560 = vsel %vm1453, %v1559, %v1556
  %v1562 = vrot.slane %v1470, 3
  %v1565 = vrot.slane %v1484, 6
  %v1568 = vrot.slane %v1500, 1
  %v1571 = vrot.slane %v1514, 4
  %v1574 = vrot.slane %v1530, 7
  %v1577 = vrot.slane %v1544, 2
  %v1580 = vrot.slane %v1560, 5
  %v1582 = vsel %vm257, %v1454, %v1562
  %v1583 = vsel %vm259, %v1582, %v1565
  %v1584 = vsel %vm261, %v1583, %v1568
  %v1585 = vsel %vm263, %v1584, %v1571
  %v1586 = vsel %vm265, %v1585, %v1574
  %v1587 = vsel %vm267, %v1586, %v1577
  %v1588 = vsel %vm269, %v1587, %v1580
  %1589 = vadd.xlane.f32.xlu0 %v1588
  %v1590 = vpop.xlane.xlu0 %1589
  %v1591 = vrcp.pop 128.0
  %v1592 = vmul.f32 %v1590, %v1591
  %v1593 = vsub.f32 %v1588, %v1592
  %v1594 = vmul.f32 %v1593, %v1593
  %1595 = vadd.xlane.f32.xlu0 %v1594
  %v1596 = vpop.xlane.xlu0 %1595
  %v1597 = vmul.f32 %v1596, %v1591
  %v1598 = vld [vmem:[%s7] sm:$0xff]
  %1600 = vset.pattern.permute.xlu0 0
  %1601 = vperm.xlu0 %1600, %v1598
  %v1602 = vpop.permute.xlu0 %1601
  %v1604 = vmul.f32 %v1602, %v1593
  %v1605 = vadd.f32 %v1597, 1e-05
  %v1606 = vrsqrt.pop %v1605
  %v1607 = vmul.f32 %v1604, %v1606
  %v1608 = vld [vmem:[%s8] sm:$0xff]
  %1610 = vset.pattern.permute.xlu0 0
  %1611 = vperm.xlu0 %1610, %v1608
  %v1612 = vpop.permute.xlu0 %1611
  %v1614 = vadd.f32 %v1607, %v1612
  %1615 = vst [vmem:[%s9] sm:$0xff] %v1614
  // Predicated region
  $region38: #{stdcn_with_gru_forward.1} parent=0 // pred_check
    _
  $region39: #{stdcn_with_gru_forward.1} parent=0 // pred_check_branch
    %1617 = sbr.rel (0) target = $region41
  $region40: #{stdcn_with_gru_forward.1} parent=0 // pred_region
    _
  $region41: #{stdcn_with_gru_forward.1} parent=0 // pred_fallthru
    _
  // Predicated region
  $region42: #{stdcn_with_gru_forward.1} parent=0 // pred_check
    _
  $region43: #{stdcn_with_gru_forward.1} parent=0 // pred_check_branch
    %1619 = sbr.rel (0) target = $region45
  $region44: #{stdcn_with_gru_forward.1} parent=0 // pred_region
    _
  $region45: #{stdcn_with_gru_forward.1} parent=0 // pred_fallthru
    _

</llo_original>
